<compile_context>
chip_gen: v5e
topology: v5e:2x2
jax: 0.10.0
libtpu: 0.0.40
codegen_flags: <defaults>
</compile_context>

<pallas_src>
import math

import jax
import jax.numpy as jnp
from jax.experimental import pallas as pl
from jax.experimental.pallas import tpu as pltpu


# ----------------------------------------------------------------------------
# Fused Pallas kernel: 5 GINE layers (+BN folded) + mean-pool + MLP head
# ----------------------------------------------------------------------------
def fused_gine_kernel(x0_ref, edge_attr_ref, src_oh_ref, tgt_oh_ref,
                      w_e_ref, b_e_ref, w_nn_ref, b_nn_ref,
                      pool_ref, w1_ref, b1_ref, w2_ref, b2_ref,
                      out_ref,
                      x_f32, x_bf16, aggr):
    l = pl.program_id(0)            # layer index (sequential, carries state)
    e = pl.program_id(1)            # edge-tile index (reduction)
    n_layers = pl.num_programs(0)
    n_etiles = pl.num_programs(1)

    # Load the (padded) initial node features into resident VMEM once.
    @pl.when((l == 0) & (e == 0))
    def _():
        x0 = x0_ref[...]
        x_f32[...] = x0
        x_bf16[...] = x0.astype(jnp.bfloat16)

    # ---- message phase for this edge tile (all MXU) ----
    # edge feature projection: Linear(edge_dim -> Fin) of this layer
    edge_p = jnp.dot(edge_attr_ref[...], w_e_ref[...],
                     preferred_element_type=jnp.float32) + b_e_ref[...]   # (tE, H)
    # gather source-node features via one-hot matmul (exact: one 1.0 per row)
    x_src = jnp.dot(src_oh_ref[...], x_bf16[...],
                    preferred_element_type=jnp.float32)                   # (tE, H)
    # GINE message, then scatter-add to target nodes (one-hot matmul)
    msg = jnp.maximum(x_src + edge_p, 0.0).astype(jnp.bfloat16)           # (tE, H)
    scat = jnp.dot(tgt_oh_ref[...], msg,
                   preferred_element_type=jnp.float32)                    # (N, H)

    @pl.when(e == 0)
    def _():
        aggr[...] = scat            # first tile initializes the accumulator

    @pl.when(e > 0)
    def _():
        aggr[...] += scat           # later tiles accumulate

    # ---- layer epilogue: GINE update + (BN-folded) Linear + ReLU ----
    @pl.when(e == n_etiles - 1)
    def _():
        h = (x_f32[...] + aggr[...]).astype(jnp.bfloat16)                 # eps = 0
        z = jnp.dot(h, w_nn_ref[...],
                    preferred_element_type=jnp.float32) + b_nn_ref[...]   # (N, H)
        act = jnp.maximum(z, 0.0)
        x_f32[...] = act                                                  # next layer input (f32)
        x_bf16[...] = act.astype(jnp.bfloat16)                            # bf16 snapshot for gather

    # ---- model head, only on the very last grid step ----
    @pl.when((l == n_layers - 1) & (e == n_etiles - 1))
    def _():
        pooled = jnp.dot(pool_ref[...], x_f32[...],
                         preferred_element_type=jnp.float32)              # (G, H) mean pool
        hh = jnp.maximum(
            jnp.dot(pooled, w1_ref[...],
                    preferred_element_type=jnp.float32) + b1_ref[...], 0.0)
        logits = jnp.dot(hh, w2_ref[...],
                         preferred_element_type=jnp.float32) + b2_ref[...]
        out_ref[...] = jax.nn.sigmoid(logits)                             # (G, 1)


def fused_forward(x0, edge_attr, src_oh, tgt_oh,
                  w_e_s, b_e_s, w_nn_s, b_nn_s,
                  pool_mat, w1, b1, w2, b2, *, edge_tile=128):
    N, H = x0.shape
    E, De = edge_attr.shape
    L = w_nn_s.shape[0]
    G = pool_mat.shape[0]
    H2 = w1.shape[1]
    assert N % 8 == 0
    assert E % edge_tile == 0
    assert edge_tile == E or edge_tile % 128 == 0   # lane-dense tgt_oh tiles
    n_etiles = E // edge_tile

    in_specs = [
        pl.BlockSpec((N, H), lambda l, e: (0, 0)),               # x0 (padded)
        pl.BlockSpec((edge_tile, De), lambda l, e: (e, 0)),      # edge_attr tile
        pl.BlockSpec((edge_tile, N), lambda l, e: (e, 0)),       # src one-hot tile
        pl.BlockSpec((N, edge_tile), lambda l, e: (0, e)),       # tgt one-hot tile
        pl.BlockSpec((None, De, H), lambda l, e: (l, 0, 0)),     # w_e  (per layer)
        pl.BlockSpec((None, 1, H), lambda l, e: (l, 0, 0)),      # b_e  (per layer)
        pl.BlockSpec((None, H, H), lambda l, e: (l, 0, 0)),      # w_nn (BN folded)
        pl.BlockSpec((None, 1, H), lambda l, e: (l, 0, 0)),      # b_nn (BN folded)
        pl.BlockSpec((G, N), lambda l, e: (0, 0)),               # mean-pool matrix
        pl.BlockSpec((H, H2), lambda l, e: (0, 0)),              # head w1
        pl.BlockSpec((1, H2), lambda l, e: (0, 0)),              # head b1
        pl.BlockSpec((H2, 1), lambda l, e: (0, 0)),              # head w2
        pl.BlockSpec((1, 1), lambda l, e: (0, 0)),               # head b2
    ]
    out_specs = pl.BlockSpec((G, 1), lambda l, e: (0, 0))

    return pl.pallas_call(
        fused_gine_kernel,
        out_shape=jax.ShapeDtypeStruct((G, 1), jnp.float32),
        grid=(L, n_etiles),
        in_specs=in_specs,
        out_specs=out_specs,
        scratch_shapes=[
            pltpu.VMEM((N, H), jnp.float32),    # x (carried across layers)
            pltpu.VMEM((N, H), jnp.bfloat16),   # bf16 snapshot of x for gather
            pltpu.VMEM((N, H), jnp.float32),    # scatter accumulator
        ],
        compiler_params=pltpu.CompilerParams(
            # layer axis carries state, edge axis is a reduction -> both arbitrary
            dimension_semantics=("arbitrary", "arbitrary")),
    )(x0, edge_attr, src_oh, tgt_oh, w_e_s, b_e_s, w_nn_s, b_nn_s,
      pool_mat, w1, b1, w2, b2)


# ----------------------------------------------------------------------------
# Glue (built once, outside any layer loop)
# ----------------------------------------------------------------------------
def gine_model5_forward(x, edge_index, edge_attr, batch, params, num_graphs,
                        *, hidden, edge_tile=128):
    N, node_dim = x.shape
    # Zero-pad node features up to hidden width so all 5 layers share one
    # stacked (H, H) weight slab (padded weight rows are zero -> no effect).
    x0 = jnp.zeros((N, hidden), jnp.float32).at[:, :node_dim].set(x)

    src, dst = edge_index[0], edge_index[1]
    node_ids = jnp.arange(N)
    src_oh = (src[:, None] == node_ids[None, :]).astype(jnp.bfloat16)    # (E, N)
    tgt_oh = (node_ids[:, None] == dst[None, :]).astype(jnp.bfloat16)    # (N, E)

    ind = (batch[None, :] == jnp.arange(num_graphs)[:, None]).astype(jnp.float32)
    pool_mat = ind / jnp.maximum(jnp.sum(ind, axis=1, keepdims=True), 1.0)  # (G, N)

    return fused_forward(x0, edge_attr.astype(jnp.bfloat16), src_oh, tgt_oh,
                         params['w_e_s'], params['b_e_s'],
                         params['w_nn_s'], params['b_nn_s'],
                         pool_mat, params['w1'], params['b1'],
                         params['w2'], params['b2'],
                         edge_tile=edge_tile)


# ----------------------------------------------------------------------------
# Pure-JAX reference (same bf16 casting points) for a sanity check
# ----------------------------------------------------------------------------
def reference_forward(x, edge_index, edge_attr_bf16, batch, params, num_graphs,
                      *, hidden):
    N, node_dim = x.shape
    src, dst = edge_index[0], edge_index[1]
    h = jnp.zeros((N, hidden), jnp.float32).at[:, :node_dim].set(x)
    L = params['w_nn_s'].shape[0]
    for l in range(L):
        h_bf = h.astype(jnp.bfloat16)
        edge_p = jnp.dot(edge_attr_bf16, params['w_e_s'][l],
                         preferred_element_type=jnp.float32) + params['b_e_s'][l]
        x_src = h_bf[src].astype(jnp.float32)
        msg = jnp.maximum(x_src + edge_p, 0.0).astype(jnp.bfloat16).astype(jnp.float32)
        aggr = jnp.zeros((N, hidden), jnp.float32).at[dst].add(msg)
        hb = (h + aggr).astype(jnp.bfloat16)
        h = jnp.maximum(jnp.dot(hb, params['w_nn_s'][l],
                                preferred_element_type=jnp.float32)
                        + params['b_nn_s'][l], 0.0)
    ind = (batch[None, :] == jnp.arange(num_graphs)[:, None]).astype(jnp.float32)
    pool = ind / jnp.maximum(jnp.sum(ind, axis=1, keepdims=True), 1.0)
    pooled = jnp.dot(pool, h, preferred_element_type=jnp.float32)
    hh = jnp.maximum(jnp.dot(pooled, params['w1'],
                             preferred_element_type=jnp.float32) + params['b1'], 0.0)
    logits = jnp.dot(hh, params['w2'],
                     preferred_element_type=jnp.float32) + params['b2']
    return jax.nn.sigmoid(logits)


# ----------------------------------------------------------------------------
# Parameter init (PyTorch-style uniform, BN folded on the host)
# ----------------------------------------------------------------------------
def linear_params(key, fan_in, fan_out):
    kw, kb = jax.random.split(key)
    bound = 1.0 / math.sqrt(fan_in)
    w = jax.random.uniform(kw, (fan_in, fan_out), jnp.float32, -bound, bound)
    b = jax.random.uniform(kb, (fan_out,), jnp.float32, -bound, bound)
    return w, b


def init_params(key, node_dim, edge_dim, hidden):
    L = 5
    bn_eps = 1e-5
    bn_scale = 1.0 / math.sqrt(1.0 + bn_eps)   # gamma=1, running_var=1, mean=0, beta=0
    keys = jax.random.split(key, 2 * L + 2)

    w_e_s = jnp.zeros((L, edge_dim, hidden), jnp.float32)
    b_e_s = jnp.zeros((L, 1, hidden), jnp.float32)
    w_nn_s = jnp.zeros((L, hidden, hidden), jnp.float32)
    b_nn_s = jnp.zeros((L, 1, hidden), jnp.float32)
    in_dims = [node_dim] + [hidden] * (L - 1)
    for l in range(L):
        we, be = linear_params(keys[2 * l], edge_dim, in_dims[l])      # edge Linear
        wn, bnn = linear_params(keys[2 * l + 1], in_dims[l], hidden)   # GINE nn Linear
        w_e_s = w_e_s.at[l, :, :in_dims[l]].set(we)
        b_e_s = b_e_s.at[l, 0, :in_dims[l]].set(be)
        w_nn_s = w_nn_s.at[l, :in_dims[l], :].set(wn)
        b_nn_s = b_nn_s.at[l, 0, :].set(bnn)
    # Fold eval-mode BatchNorm1d (affine at default init) into the Linear.
    w_nn_s = w_nn_s * bn_scale
    b_nn_s = b_nn_s * bn_scale

    w1, b1 = linear_params(keys[2 * L], hidden, hidden // 2)
    w2, b2 = linear_params(keys[2 * L + 1], hidden // 2, 1)
    return dict(
        w_e_s=w_e_s.astype(jnp.bfloat16), b_e_s=b_e_s,
        w_nn_s=w_nn_s.astype(jnp.bfloat16), b_nn_s=b_nn_s,
        w1=w1, b1=b1[None, :], w2=w2, b2=b2[None, :])


# ----------------------------------------------------------------------------
# Demo
# ----------------------------------------------------------------------------
if __name__ == "__main__":
    NODE_DIM, EDGE_DIM, HIDDEN = 64, 32, 256
    NODES_PER_GRAPH, NUM_GRAPHS = 16, 2
    N = NODES_PER_GRAPH * NUM_GRAPHS            # 32 nodes
    E_PER_GRAPH = 128
    E = E_PER_GRAPH * NUM_GRAPHS                # 256 edges (2 edge tiles of 128)

    key = jax.random.PRNGKey(0)
    kx, ke, ks, kd, kp = jax.random.split(key, 5)

    x = jax.random.normal(kx, (N, NODE_DIM), jnp.float32)
    edge_attr = jax.random.normal(ke, (E, EDGE_DIM), jnp.float32)
    batch = jnp.repeat(jnp.arange(NUM_GRAPHS, dtype=jnp.int32), NODES_PER_GRAPH)

    # random edges, constrained within each graph
    src_local = jax.random.randint(ks, (E,), 0, NODES_PER_GRAPH, jnp.int32)
    dst_local = jax.random.randint(kd, (E,), 0, NODES_PER_GRAPH, jnp.int32)
    edge_graph = jnp.repeat(jnp.arange(NUM_GRAPHS, dtype=jnp.int32), E_PER_GRAPH)
    edge_index = jnp.stack([src_local + edge_graph * NODES_PER_GRAPH,
                            dst_local + edge_graph * NODES_PER_GRAPH])   # (2, E)

    params = init_params(kp, NODE_DIM, EDGE_DIM, HIDDEN)

    out = gine_model5_forward(x, edge_index, edge_attr, batch, params,
                              NUM_GRAPHS, hidden=HIDDEN, edge_tile=128)
    out = jax.block_until_ready(out)
    assert out.shape == (NUM_GRAPHS, 1)
    assert bool(jnp.all(jnp.isfinite(out)))
    assert bool(jnp.all((out >= 0.0) & (out <= 1.0)))

    ref = reference_forward(x, edge_index, edge_attr.astype(jnp.bfloat16), batch,
                            params, NUM_GRAPHS, hidden=HIDDEN)
    ref = jax.block_until_ready(ref)
    assert bool(jnp.allclose(out, ref, atol=2e-2)), (out, ref)

    print("KERNEL_OK")
</pallas_src>

<mosaic_0001>
module attributes {stable_mosaic.version = 11 : i64} {
  func.func @fused_gine_kernel(%arg0: i32, %arg1: i32, %arg2: memref<32x256xf32, #tpu.memory_space<vmem>>, %arg3: memref<128x32xbf16, #tpu.memory_space<vmem>>, %arg4: memref<128x32xbf16, #tpu.memory_space<vmem>>, %arg5: memref<32x128xbf16, #tpu.memory_space<vmem>>, %arg6: memref<1x32x256xbf16, #tpu.memory_space<vmem>>, %arg7: memref<1x1x256xf32, #tpu.memory_space<vmem>>, %arg8: memref<1x256x256xbf16, #tpu.memory_space<vmem>>, %arg9: memref<1x1x256xf32, #tpu.memory_space<vmem>>, %arg10: memref<2x32xf32, #tpu.memory_space<vmem>>, %arg11: memref<256x128xf32, #tpu.memory_space<vmem>>, %arg12: memref<1x128xf32, #tpu.memory_space<vmem>>, %arg13: memref<128x1xf32, #tpu.memory_space<vmem>>, %arg14: memref<1x1xf32, #tpu.memory_space<vmem>>, %arg15: memref<2x1xf32, #tpu.memory_space<vmem>>, %arg16: memref<32x256xf32, #tpu.memory_space<vmem>>, %arg17: memref<32x256xbf16, #tpu.memory_space<vmem>>, %arg18: memref<32x256xf32, #tpu.memory_space<vmem>>) attributes {dimension_semantics = [#tpu.dimension_semantics<arbitrary>, #tpu.dimension_semantics<arbitrary>], iteration_bounds = array<i64: 5, 2>, scalar_prefetch = 0 : i64, scratch_operands = 3 : i64, tpu.core_type = #tpu.core_type<tc>, window_params = [{pipeline_mode = #tpu.pipeline_mode<synchronous>, transform_indices = @transform_0, window_bounds = array<i64: 32, 256>}, {transform_indices = @transform_1, window_bounds = array<i64: 128, 32>}, {transform_indices = @transform_2, window_bounds = array<i64: 128, 32>}, {transform_indices = @transform_3, window_bounds = array<i64: 32, 128>}, {transform_indices = @transform_4, window_bounds = array<i64: 1, 32, 256>}, {transform_indices = @transform_5, window_bounds = array<i64: 1, 1, 256>}, {transform_indices = @transform_6, window_bounds = array<i64: 1, 256, 256>}, {transform_indices = @transform_7, window_bounds = array<i64: 1, 1, 256>}, {pipeline_mode = #tpu.pipeline_mode<synchronous>, transform_indices = @transform_8, window_bounds = array<i64: 2, 32>}, {pipeline_mode = #tpu.pipeline_mode<synchronous>, transform_indices = @transform_9, window_bounds = array<i64: 256, 128>}, {pipeline_mode = #tpu.pipeline_mode<synchronous>, transform_indices = @transform_10, window_bounds = array<i64: 1, 128>}, {pipeline_mode = #tpu.pipeline_mode<synchronous>, transform_indices = @transform_11, window_bounds = array<i64: 128, 1>}, {pipeline_mode = #tpu.pipeline_mode<synchronous>, transform_indices = @transform_12, window_bounds = array<i64: 1, 1>}, {pipeline_mode = #tpu.pipeline_mode<synchronous>, transform_indices = @transform_13, window_bounds = array<i64: 2, 1>}]} {
    %c0_i32 = arith.constant 0 : i32
    %0 = arith.cmpi eq, %arg0, %c0_i32 : i32
    %c0_i32_0 = arith.constant 0 : i32
    %1 = arith.cmpi eq, %arg1, %c0_i32_0 : i32
    %2 = arith.andi %0, %1 : i1
    %3 = arith.extui %2 : i1 to i32
    %c0_i32_1 = arith.constant 0 : i32
    %4 = arith.cmpi ne, %3, %c0_i32_1 : i32
    scf.if %4 {
      %c0_25 = arith.constant 0 : index
      %c0_26 = arith.constant 0 : index
      %36 = vector.load %arg2[%c0_25, %c0_26] : memref<32x256xf32, #tpu.memory_space<vmem>>, vector<32x256xf32>
      %c0_27 = arith.constant 0 : index
      %c0_28 = arith.constant 0 : index
      %37 = vector.load %arg16[%c0_27, %c0_28] : memref<32x256xf32, #tpu.memory_space<vmem>>, vector<32x256xf32>
      tpu.vector_store %arg16[%c0_27, %c0_28], %36 {strides = array<i32>} : memref<32x256xf32, #tpu.memory_space<vmem>>, vector<32x256xf32>,
      %38 = arith.truncf %36 : vector<32x256xf32> to vector<32x256xbf16>
      %c0_29 = arith.constant 0 : index
      %c0_30 = arith.constant 0 : index
      %39 = vector.load %arg17[%c0_29, %c0_30] : memref<32x256xbf16, #tpu.memory_space<vmem>>, vector<32x256xbf16>
      tpu.vector_store %arg17[%c0_29, %c0_30], %38 {strides = array<i32>} : memref<32x256xbf16, #tpu.memory_space<vmem>>, vector<32x256xbf16>,
    } else {
    }
    %c0 = arith.constant 0 : index
    %c0_2 = arith.constant 0 : index
    %5 = vector.load %arg3[%c0, %c0_2] : memref<128x32xbf16, #tpu.memory_space<vmem>>, vector<128x32xbf16>
    %c0_3 = arith.constant 0 : index
    %c0_4 = arith.constant 0 : index
    %c0_5 = arith.constant 0 : index
    %6 = vector.load %arg6[%c0_3, %c0_4, %c0_5] : memref<1x32x256xbf16, #tpu.memory_space<vmem>>, vector<1x32x256xbf16>
    %7 = vector.shape_cast %6 : vector<1x32x256xbf16> to vector<32x256xbf16>
    %cst = arith.constant dense<0.000000e+00> : vector<128x256xf32>
    %8 = tpu.matmul %5, %7, %cst {dimension_numbers = #tpu.dot_dimension_numbers<[1], [0], [0], [1], [0, 0, 1, 1], [], []>} : vector<128x32xbf16>, vector<32x256xbf16>, vector<128x256xf32> -> vector<128x256xf32>
    %c0_6 = arith.constant 0 : index
    %c0_7 = arith.constant 0 : index
    %c0_8 = arith.constant 0 : index
    %9 = vector.load %arg7[%c0_6, %c0_7, %c0_8] : memref<1x1x256xf32, #tpu.memory_space<vmem>>, vector<1x1x256xf32>
    %10 = vector.shape_cast %9 : vector<1x1x256xf32> to vector<1x256xf32>
    %11 = vector.broadcast %10 : vector<1x256xf32> to vector<128x256xf32>
    %12 = arith.addf %8, %11 : vector<128x256xf32>
    %c0_9 = arith.constant 0 : index
    %c0_10 = arith.constant 0 : index
    %13 = vector.load %arg4[%c0_9, %c0_10] : memref<128x32xbf16, #tpu.memory_space<vmem>>, vector<128x32xbf16>
    %c0_11 = arith.constant 0 : index
    %c0_12 = arith.constant 0 : index
    %14 = vector.load %arg17[%c0_11, %c0_12] : memref<32x256xbf16, #tpu.memory_space<vmem>>, vector<32x256xbf16>
    %cst_13 = arith.constant dense<0.000000e+00> : vector<128x256xf32>
    %15 = tpu.matmul %13, %14, %cst_13 {dimension_numbers = #tpu.dot_dimension_numbers<[1], [0], [0], [1], [0, 0, 1, 1], [], []>} : vector<128x32xbf16>, vector<32x256xbf16>, vector<128x256xf32> -> vector<128x256xf32>
    %16 = arith.addf %15, %12 : vector<128x256xf32>
    %cst_14 = arith.constant 0.000000e+00 : f32
    %17 = vector.broadcast %cst_14 : f32 to vector<128x256xf32>
    %18 = arith.maximumf %16, %17 : vector<128x256xf32>
    %19 = arith.truncf %18 : vector<128x256xf32> to vector<128x256xbf16>
    %c0_15 = arith.constant 0 : index
    %c0_16 = arith.constant 0 : index
    %20 = vector.load %arg5[%c0_15, %c0_16] : memref<32x128xbf16, #tpu.memory_space<vmem>>, vector<32x128xbf16>
    %cst_17 = arith.constant dense<0.000000e+00> : vector<32x256xf32>
    %21 = tpu.matmul %20, %19, %cst_17 {dimension_numbers = #tpu.dot_dimension_numbers<[1], [0], [0], [1], [0, 0, 1, 1], [], []>} : vector<32x128xbf16>, vector<128x256xbf16>, vector<32x256xf32> -> vector<32x256xf32>
    %c0_i32_18 = arith.constant 0 : i32
    %22 = arith.cmpi eq, %arg1, %c0_i32_18 : i32
    %23 = arith.extui %22 : i1 to i32
    %c0_i32_19 = arith.constant 0 : i32
    %24 = arith.cmpi ne, %23, %c0_i32_19 : i32
    scf.if %24 {
      %c0_25 = arith.constant 0 : index
      %c0_26 = arith.constant 0 : index
      %36 = vector.load %arg18[%c0_25, %c0_26] : memref<32x256xf32, #tpu.memory_space<vmem>>, vector<32x256xf32>
      tpu.vector_store %arg18[%c0_25, %c0_26], %21 {strides = array<i32>} : memref<32x256xf32, #tpu.memory_space<vmem>>, vector<32x256xf32>,
    } else {
    }
    %c0_i32_20 = arith.constant 0 : i32
    %25 = arith.cmpi sgt, %arg1, %c0_i32_20 : i32
    %26 = arith.extui %25 : i1 to i32
    %c0_i32_21 = arith.constant 0 : i32
    %27 = arith.cmpi ne, %26, %c0_i32_21 : i32
    scf.if %27 {
      %c0_25 = arith.constant 0 : index
      %c0_26 = arith.constant 0 : index
      %36 = vector.load %arg18[%c0_25, %c0_26] : memref<32x256xf32, #tpu.memory_space<vmem>>, vector<32x256xf32>
      %37 = arith.addf %36, %21 : vector<32x256xf32>
      %c0_27 = arith.constant 0 : index
      %c0_28 = arith.constant 0 : index
      %38 = vector.load %arg18[%c0_27, %c0_28] : memref<32x256xf32, #tpu.memory_space<vmem>>, vector<32x256xf32>
      tpu.vector_store %arg18[%c0_27, %c0_28], %37 {strides = array<i32>} : memref<32x256xf32, #tpu.memory_space<vmem>>, vector<32x256xf32>,
    } else {
    }
    %c1_i32 = arith.constant 1 : i32
    %28 = arith.cmpi eq, %arg1, %c1_i32 : i32
    %29 = arith.extui %28 : i1 to i32
    %c0_i32_22 = arith.constant 0 : i32
    %30 = arith.cmpi ne, %29, %c0_i32_22 : i32
    scf.if %30 {
      %c0_25 = arith.constant 0 : index
      %c0_26 = arith.constant 0 : index
      %36 = vector.load %arg16[%c0_25, %c0_26] : memref<32x256xf32, #tpu.memory_space<vmem>>, vector<32x256xf32>
      %c0_27 = arith.constant 0 : index
      %c0_28 = arith.constant 0 : index
      %37 = vector.load %arg18[%c0_27, %c0_28] : memref<32x256xf32, #tpu.memory_space<vmem>>, vector<32x256xf32>
      %38 = arith.addf %36, %37 : vector<32x256xf32>
      %39 = arith.truncf %38 : vector<32x256xf32> to vector<32x256xbf16>
      %c0_29 = arith.constant 0 : index
      %c0_30 = arith.constant 0 : index
      %c0_31 = arith.constant 0 : index
      %40 = vector.load %arg8[%c0_29, %c0_30, %c0_31] : memref<1x256x256xbf16, #tpu.memory_space<vmem>>, vector<1x256x256xbf16>
      %41 = vector.shape_cast %40 : vector<1x256x256xbf16> to vector<256x256xbf16>
      %cst_32 = arith.constant dense<0.000000e+00> : vector<32x256xf32>
      %42 = tpu.matmul %39, %41, %cst_32 {dimension_numbers = #tpu.dot_dimension_numbers<[1], [0], [0], [1], [0, 0, 1, 1], [], []>} : vector<32x256xbf16>, vector<256x256xbf16>, vector<32x256xf32> -> vector<32x256xf32>
      %c0_33 = arith.constant 0 : index
      %c0_34 = arith.constant 0 : index
      %c0_35 = arith.constant 0 : index
      %43 = vector.load %arg9[%c0_33, %c0_34, %c0_35] : memref<1x1x256xf32, #tpu.memory_space<vmem>>, vector<1x1x256xf32>
      %44 = vector.shape_cast %43 : vector<1x1x256xf32> to vector<1x256xf32>
      %45 = vector.broadcast %44 : vector<1x256xf32> to vector<32x256xf32>
      %46 = arith.addf %42, %45 : vector<32x256xf32>
      %cst_36 = arith.constant 0.000000e+00 : f32
      %47 = vector.broadcast %cst_36 : f32 to vector<32x256xf32>
      %48 = arith.maximumf %46, %47 : vector<32x256xf32>
      %c0_37 = arith.constant 0 : index
      %c0_38 = arith.constant 0 : index
      %49 = vector.load %arg16[%c0_37, %c0_38] : memref<32x256xf32, #tpu.memory_space<vmem>>, vector<32x256xf32>
      tpu.vector_store %arg16[%c0_37, %c0_38], %48 {strides = array<i32>} : memref<32x256xf32, #tpu.memory_space<vmem>>, vector<32x256xf32>,
      %50 = arith.truncf %48 : vector<32x256xf32> to vector<32x256xbf16>
      %c0_39 = arith.constant 0 : index
      %c0_40 = arith.constant 0 : index
      %51 = vector.load %arg17[%c0_39, %c0_40] : memref<32x256xbf16, #tpu.memory_space<vmem>>, vector<32x256xbf16>
      tpu.vector_store %arg17[%c0_39, %c0_40], %50 {strides = array<i32>} : memref<32x256xbf16, #tpu.memory_space<vmem>>, vector<32x256xbf16>,
    } else {
    }
    %c4_i32 = arith.constant 4 : i32
    %31 = arith.cmpi eq, %arg0, %c4_i32 : i32
    %c1_i32_23 = arith.constant 1 : i32
    %32 = arith.cmpi eq, %arg1, %c1_i32_23 : i32
    %33 = arith.andi %31, %32 : i1
    %34 = arith.extui %33 : i1 to i32
    %c0_i32_24 = arith.constant 0 : i32
    %35 = arith.cmpi ne, %34, %c0_i32_24 : i32
    scf.if %35 {
      %c0_25 = arith.constant 0 : index
      %c0_26 = arith.constant 0 : index
      %36 = vector.load %arg10[%c0_25, %c0_26] : memref<2x32xf32, #tpu.memory_space<vmem>>, vector<2x32xf32>
      %c0_27 = arith.constant 0 : index
      %c0_28 = arith.constant 0 : index
      %37 = vector.load %arg16[%c0_27, %c0_28] : memref<32x256xf32, #tpu.memory_space<vmem>>, vector<32x256xf32>
      %cst_29 = arith.constant dense<0.000000e+00> : vector<2x256xf32>
      %38 = tpu.matmul %36, %37, %cst_29 {dimension_numbers = #tpu.dot_dimension_numbers<[1], [0], [0], [1], [0, 0, 1, 1], [], []>} : vector<2x32xf32>, vector<32x256xf32>, vector<2x256xf32> -> vector<2x256xf32>
      %c0_30 = arith.constant 0 : index
      %c0_31 = arith.constant 0 : index
      %39 = vector.load %arg11[%c0_30, %c0_31] : memref<256x128xf32, #tpu.memory_space<vmem>>, vector<256x128xf32>
      %cst_32 = arith.constant dense<0.000000e+00> : vector<2x128xf32>
      %40 = tpu.matmul %38, %39, %cst_32 {dimension_numbers = #tpu.dot_dimension_numbers<[1], [0], [0], [1], [0, 0, 1, 1], [], []>} : vector<2x256xf32>, vector<256x128xf32>, vector<2x128xf32> -> vector<2x128xf32>
      %c0_33 = arith.constant 0 : index
      %c0_34 = arith.constant 0 : index
      %41 = vector.load %arg12[%c0_33, %c0_34] : memref<1x128xf32, #tpu.memory_space<vmem>>, vector<1x128xf32>
      %42 = vector.broadcast %41 : vector<1x128xf32> to vector<2x128xf32>
      %43 = arith.addf %40, %42 : vector<2x128xf32>
      %cst_35 = arith.constant 0.000000e+00 : f32
      %44 = vector.broadcast %cst_35 : f32 to vector<2x128xf32>
      %45 = arith.maximumf %43, %44 : vector<2x128xf32>
      %c0_36 = arith.constant 0 : index
      %c0_37 = arith.constant 0 : index
      %46 = vector.load %arg13[%c0_36, %c0_37] : memref<128x1xf32, #tpu.memory_space<vmem>>, vector<128x1xf32>
      %cst_38 = arith.constant dense<0.000000e+00> : vector<2x1xf32>
      %47 = tpu.matmul %45, %46, %cst_38 {dimension_numbers = #tpu.dot_dimension_numbers<[1], [0], [0], [1], [0, 0, 1, 1], [], []>} : vector<2x128xf32>, vector<128x1xf32>, vector<2x1xf32> -> vector<2x1xf32>
      %c0_39 = arith.constant 0 : index
      %c0_40 = arith.constant 0 : index
      %48 = vector.load %arg14[%c0_39, %c0_40] : memref<1x1xf32, #tpu.memory_space<vmem>>, vector<1x1xf32>
      %49 = vector.broadcast %48 : vector<1x1xf32> to vector<2x1xf32>
      %50 = arith.addf %47, %49 : vector<2x1xf32>
      %51 = arith.negf %50 : vector<2x1xf32>
      %52 = math.exp %51 : vector<2x1xf32>
      %cst_41 = arith.constant 1.000000e+00 : f32
      %53 = vector.broadcast %cst_41 : f32 to vector<2x1xf32>
      %54 = arith.addf %53, %52 : vector<2x1xf32>
      %55 = arith.divf %53, %54 : vector<2x1xf32>
      %c0_42 = arith.constant 0 : index
      %c0_43 = arith.constant 0 : index
      %56 = vector.load %arg15[%c0_42, %c0_43] : memref<2x1xf32, #tpu.memory_space<vmem>>, vector<2x1xf32>
      tpu.vector_store %arg15[%c0_42, %c0_43], %55 {strides = array<i32>} : memref<2x1xf32, #tpu.memory_space<vmem>>, vector<2x1xf32>,
    } else {
    }
    return
  }
  func.func @transform_0(%arg0: i32, %arg1: i32) -> (i32, i32) {
    %c0_i32 = arith.constant 0 : i32
    %c0_i32_0 = arith.constant 0 : i32
    %c0_i32_1 = arith.constant 0 : i32
    return %c0_i32, %c0_i32_0 : i32, i32
  }
  func.func @transform_1(%arg0: i32, %arg1: i32) -> (i32, i32) {
    %c0_i32 = arith.constant 0 : i32
    %c0_i32_0 = arith.constant 0 : i32
    return %arg1, %c0_i32 : i32, i32
  }
  func.func @transform_2(%arg0: i32, %arg1: i32) -> (i32, i32) {
    %c0_i32 = arith.constant 0 : i32
    %c0_i32_0 = arith.constant 0 : i32
    return %arg1, %c0_i32 : i32, i32
  }
  func.func @transform_3(%arg0: i32, %arg1: i32) -> (i32, i32) {
    %c0_i32 = arith.constant 0 : i32
    %c0_i32_0 = arith.constant 0 : i32
    return %c0_i32, %arg1 : i32, i32
  }
  func.func @transform_4(%arg0: i32, %arg1: i32) -> (i32, i32, i32) {
    %c0_i32 = arith.constant 0 : i32
    %c0_i32_0 = arith.constant 0 : i32
    %c0_i32_1 = arith.constant 0 : i32
    return %arg0, %c0_i32, %c0_i32_0 : i32, i32, i32
  }
  func.func @transform_5(%arg0: i32, %arg1: i32) -> (i32, i32, i32) {
    %c0_i32 = arith.constant 0 : i32
    %c0_i32_0 = arith.constant 0 : i32
    %c0_i32_1 = arith.constant 0 : i32
    return %arg0, %c0_i32, %c0_i32_0 : i32, i32, i32
  }
  func.func @transform_6(%arg0: i32, %arg1: i32) -> (i32, i32, i32) {
    %c0_i32 = arith.constant 0 : i32
    %c0_i32_0 = arith.constant 0 : i32
    %c0_i32_1 = arith.constant 0 : i32
    return %arg0, %c0_i32, %c0_i32_0 : i32, i32, i32
  }
  func.func @transform_7(%arg0: i32, %arg1: i32) -> (i32, i32, i32) {
    %c0_i32 = arith.constant 0 : i32
    %c0_i32_0 = arith.constant 0 : i32
    %c0_i32_1 = arith.constant 0 : i32
    return %arg0, %c0_i32, %c0_i32_0 : i32, i32, i32
  }
  func.func @transform_8(%arg0: i32, %arg1: i32) -> (i32, i32) {
    %c0_i32 = arith.constant 0 : i32
    %c0_i32_0 = arith.constant 0 : i32
    %c0_i32_1 = arith.constant 0 : i32
    return %c0_i32, %c0_i32_0 : i32, i32
  }
  func.func @transform_9(%arg0: i32, %arg1: i32) -> (i32, i32) {
    %c0_i32 = arith.constant 0 : i32
    %c0_i32_0 = arith.constant 0 : i32
    %c0_i32_1 = arith.constant 0 : i32
    return %c0_i32, %c0_i32_0 : i32, i32
  }
  func.func @transform_10(%arg0: i32, %arg1: i32) -> (i32, i32) {
    %c0_i32 = arith.constant 0 : i32
    %c0_i32_0 = arith.constant 0 : i32
    %c0_i32_1 = arith.constant 0 : i32
    return %c0_i32, %c0_i32_0 : i32, i32
  }
  func.func @transform_11(%arg0: i32, %arg1: i32) -> (i32, i32) {
    %c0_i32 = arith.constant 0 : i32
    %c0_i32_0 = arith.constant 0 : i32
    %c0_i32_1 = arith.constant 0 : i32
    return %c0_i32, %c0_i32_0 : i32, i32
  }
  func.func @transform_12(%arg0: i32, %arg1: i32) -> (i32, i32) {
    %c0_i32 = arith.constant 0 : i32
    %c0_i32_0 = arith.constant 0 : i32
    %c0_i32_1 = arith.constant 0 : i32
    return %c0_i32, %c0_i32_0 : i32, i32
  }
  func.func @transform_13(%arg0: i32, %arg1: i32) -> (i32, i32) {
    %c0_i32 = arith.constant 0 : i32
    %c0_i32_0 = arith.constant 0 : i32
    %c0_i32_1 = arith.constant 0 : i32
    return %c0_i32, %c0_i32_0 : i32, i32
  }
}

</mosaic_0001>

<llo_original>
// kernel: tpu_custom_call.1
$region0: #{tpu_custom_call.1}
  #allocation0 [shape = 'u32[]', space=smem, size = 0x4, offset = 0x4, fixed_abs, tag = 'smem constant byte address 0x4 - core index']
  #allocation1 [shape = 'u32[72,128]{1,0:T(1,128)}', space=vmem, size = 0x9000, scoped, tag = 'internal scratch']
  #allocation2 [shape = 'f32[32,256]{1,0:T(8,128)}', space=vmem, size = 0x8000, scoped, tag = 'scratch operand']
  #allocation3 [shape = 'bf16[32,256]{1,0:T(8,128)(2,1)}', space=vmem, size = 0x4000, scoped, tag = 'scratch operand']
  #allocation4 [shape = 'f32[32,256]{1,0:T(8,128)}', space=vmem, size = 0x8000, scoped, tag = 'scratch operand']
  #allocation5 [shape = 'f32[1,1]{1,0:T(1,128)S(1)}', space=vmem, size = 0x200, scoped, tag = 'scoped memory for tpu_custom_call.1']
  %s0 = inlined_call_operand.hbm [shape: f32[32,256], index: 0, kind: input, shape index: {}]
  %s1 = inlined_call_operand.vmem [shape: bf16[256,32], index: 1, kind: input, shape index: {}]
  %s2 = inlined_call_operand.vmem [shape: bf16[256,32], index: 2, kind: input, shape index: {}]
  %s3 = inlined_call_operand.hbm [shape: bf16[32,256], index: 3, kind: input, shape index: {}]
  %s4 = inlined_call_operand.vmem [shape: bf16[5,32,256], index: 4, kind: input, shape index: {}]
  %s5 = inlined_call_operand.hbm [shape: f32[5,1,256], index: 5, kind: input, shape index: {}]
  %s6 = inlined_call_operand.hbm [shape: bf16[5,256,256], index: 6, kind: input, shape index: {}]
  %s7 = inlined_call_operand.hbm [shape: f32[5,1,256], index: 7, kind: input, shape index: {}]
  %s8 = inlined_call_operand.vmem [shape: f32[2,32], index: 8, kind: input, shape index: {}]
  %s9 = inlined_call_operand.vmem [shape: f32[256,128], index: 9, kind: input, shape index: {}]
  %s10 = inlined_call_operand.vmem [shape: f32[1,128], index: 10, kind: input, shape index: {}]
  %s11 = inlined_call_operand.vmem [shape: f32[128,1], index: 11, kind: input, shape index: {}]
  %s12 = inlined_call_operand.<no memory space> [shape: f32[1,1], index: 12, kind: input, shape index: {}]
  %s13 = inlined_call_operand.vmem [shape: f32[2,1], index: 13, kind: output, shape index: {}]
  %s14 = sld [smem:[#allocation0]]
  $region125: #{tpu_custom_call.1} parent=0
    _
  %s16 = ssub.s32 1, %s14
  %s17 = scalar_select 0, %s16, %s14
  %v18 = vstv %s12
  %19 = vst [vmem:[#allocation5] sm:$0x1] %v18
  $region1: #{tpu_custom_call.1} parent=0
    #allocation6 [shape = 'u8[32768]{0}', space=vmem, size = 0x8000, scoped, tag = 'input window, operand 0, single buffered']
    #allocation7 [shape = 's32[2]{0}', space=sflag, size = 0x8, scoped, tag = 'scoped memory for tpu_custom_call.1']
    #allocation8 [shape = 'u8[16384]{0}', space=vmem, size = 0x4000, scoped, tag = 'input window, operand 3']
    #allocation9 [shape = 's32[2]{0}', space=sflag, size = 0x8, scoped, tag = 'scoped memory for tpu_custom_call.1']
    #allocation10 [shape = 'u8[2048]{0}', space=vmem, size = 0x800, scoped, tag = 'input window, operand 5']
    #allocation11 [shape = 'u8[262144]{0}', space=vmem, size = 0x40000, scoped, tag = 'input window, operand 6']
    #allocation12 [shape = 's32[2]{0}', space=sflag, size = 0x8, scoped, tag = 'scoped memory for tpu_custom_call.1']
    #allocation13 [shape = 'u8[2048]{0}', space=vmem, size = 0x800, scoped, tag = 'input window, operand 7']
    %20 = vsyncpa [#allocation7], 0
    %21 = vsyncpa [#allocation9], 0
    %s22 = scalar_lea.sflag [#allocation9], 1
    %23 = vsyncpa %s22, 0
    %24 = vsyncpa [#allocation12], 0
    %s25 = scalar_lea.sflag [#allocation12], 1
    %26 = vsyncpa %s25, 0
    loop: start=0, step=1, limit=12
    $region2: #{tpu_custom_call.1} parent=1 // loop_pre_header
      _
    $region3: #{tpu_custom_call.1} parent=1 // loop_header
      %s28 = sphi 0, %s32
      %p29 = scmp.ge.s32.totalorder %s28, 12
      %s35 = sphi 0, %s47
      %s36 = sphi 0, %s43
      %s37 = sphi 0, %s35
      %s38 = sphi 0, %s36
      %s39 = sphi 0, %s37
      %s40 = sphi 0, %s38
      %s48 = sphi 0, %s48
      %s50 = sphi 0, %s48
      %s51 = sphi 0, %s50
      %s65 = sphi 0, %s51
      %s71 = sphi 0, %s73
      %s74 = sphi 0, %s71
      %s75 = sphi 0, %s74
      %s91 = sphi 0, %s75
      %s97 = sphi 0, %s99
      %s100 = sphi 0, %s97
      %s101 = sphi 0, %s100
      %s117 = sphi 0, %s101
      %s123 = sphi 0, %s125
      %s126 = sphi 0, %s123
      %s127 = sphi 0, %s126
      %s143 = sphi 0, %s127
      %s149 = sphi 0, %s151
      %s152 = sphi 0, %s149
      %s153 = sphi 0, %s152
      %s169 = sphi 0, %s153
      %s175 = sphi 0, %s177
      %s178 = sphi 0, %s175
      %s179 = sphi 0, %s178
      %s195 = sphi 0, %s179
      %s201 = sphi 0, %s203
      %s204 = sphi 0, %s201
      %s205 = sphi 0, %s204
      %s221 = sphi 0, %s205
      %s227 = sphi 0, %s229
      %s230 = sphi 0, %s227
      %s231 = sphi 0, %s230
      %s247 = sphi 0, %s231
      %s251 = sphi 0, %s251
      %s253 = sphi 0, %s251
      %s254 = sphi 0, %s253
      %s268 = sphi 0, %s254
      %s272 = sphi 0, %s272
      %s274 = sphi 0, %s272
      %s275 = sphi 0, %s274
      %s289 = sphi 0, %s275
      %s293 = sphi 0, %s293
      %s295 = sphi 0, %s293
      %s296 = sphi 0, %s295
      %s310 = sphi 0, %s296
      %s314 = sphi 0, %s314
      %s316 = sphi 0, %s314
      %s317 = sphi 0, %s316
      %s331 = sphi 0, %s317
      %s335 = sphi 0, %s335
      %s337 = sphi 0, %s335
      %s338 = sphi 0, %s337
      %s352 = sphi 0, %s338
      %s356 = sphi 0, %s356
      %s358 = sphi 0, %s356
      %s359 = sphi 0, %s358
      %s373 = sphi 0, %s359
    $region4: #{tpu_custom_call.1} parent=1 // loop_header_branch
      %31 = sbr.rel (%p29) target = $region8
    $region5: #{tpu_custom_call.1} parent=1 // loop_body
      %s33 = ssub.s32 %s28, 1
      %s34 = ssub.s32 %s28, 2
      %s41 = sadd.s32 1, %s36
      %p42 = scmp.ge.s32.totalorder %s41, 2
      %s43 = scalar_select %p42, 0, %s41
      %s44 = sadd.s32 1, %s35
      %s45 = scalar_select %p42, %s44, %s35
      %p46 = scmp.ge.s32.totalorder %s45, 5
      %s47 = scalar_select %p46, 0, %s45
      %s49 = sadd.s32 %s48, 1
      %p52 = scmp.eq.s32.totalorder %s28, 9
      %p53 = scmp.ne.s32.totalorder %s48, %s50
      %p54 = scmp.eq.s32.totalorder %s28, 0
      %p55 = por %p53, %p54
      %p56 = scmp.ne.s32.totalorder %s48, %s50
      %p57 = scmp.eq.s32.totalorder %s33, 9
      %p58 = por %p56, %p57
      %p59 = scmp.ne.s32.totalorder %s50, %s51
      %p60 = scmp.eq.s32.totalorder %s33, 0
      %p61 = por %p59, %p60
      %p62 = scmp.ne.s32.totalorder %s50, %s51
      %p63 = scmp.eq.s32.totalorder %s34, 9
      %p64 = por %p62, %p63
      %p66 = scmp.ne.s32.totalorder %s51, %s65
      %p67 = scmp.eq.s32.totalorder %s34, 0
      %p68 = por %p66, %p67
      %s69 = ssub.s32 %s36, %s43
      %p70 = scmp.eq.s32.totalorder %s69, 0
      %s72 = sadd.s32 %s71, 1
      %s73 = scalar_select %p70, %s71, %s72
      %p76 = pneg %p70
      %p77 = scmp.eq.s32.totalorder %s28, 9
      %p78 = por %p76, %p77
      %p79 = scmp.ne.s32.totalorder %s71, %s74
      %p80 = scmp.eq.s32.totalorder %s28, 0
      %p81 = por %p79, %p80
      %p82 = scmp.ne.s32.totalorder %s71, %s74
      %p83 = scmp.eq.s32.totalorder %s33, 9
      %p84 = por %p82, %p83
      %p85 = scmp.ne.s32.totalorder %s74, %s75
      %p86 = scmp.eq.s32.totalorder %s33, 0
      %p87 = por %p85, %p86
      %p88 = scmp.ne.s32.totalorder %s74, %s75
      %p89 = scmp.eq.s32.totalorder %s34, 9
      %p90 = por %p88, %p89
      %p92 = scmp.ne.s32.totalorder %s75, %s91
      %p93 = scmp.eq.s32.totalorder %s34, 0
      %p94 = por %p92, %p93
      %s95 = ssub.s32 %s36, %s43
      %p96 = scmp.eq.s32.totalorder %s95, 0
      %s98 = sadd.s32 %s97, 1
      %s99 = scalar_select %p96, %s97, %s98
      %p102 = pneg %p96
      %p103 = scmp.eq.s32.totalorder %s28, 9
      %p104 = por %p102, %p103
      %p105 = scmp.ne.s32.totalorder %s97, %s100
      %p106 = scmp.eq.s32.totalorder %s28, 0
      %p107 = por %p105, %p106
      %p108 = scmp.ne.s32.totalorder %s97, %s100
      %p109 = scmp.eq.s32.totalorder %s33, 9
      %p110 = por %p108, %p109
      %p111 = scmp.ne.s32.totalorder %s100, %s101
      %p112 = scmp.eq.s32.totalorder %s33, 0
      %p113 = por %p111, %p112
      %p114 = scmp.ne.s32.totalorder %s100, %s101
      %p115 = scmp.eq.s32.totalorder %s34, 9
      %p116 = por %p114, %p115
      %p118 = scmp.ne.s32.totalorder %s101, %s117
      %p119 = scmp.eq.s32.totalorder %s34, 0
      %p120 = por %p118, %p119
      %s121 = ssub.s32 %s36, %s43
      %p122 = scmp.eq.s32.totalorder %s121, 0
      %s124 = sadd.s32 %s123, 1
      %s125 = scalar_select %p122, %s123, %s124
      %p128 = pneg %p122
      %p129 = scmp.eq.s32.totalorder %s28, 9
      %p130 = por %p128, %p129
      %p131 = scmp.ne.s32.totalorder %s123, %s126
      %p132 = scmp.eq.s32.totalorder %s28, 0
      %p133 = por %p131, %p132
      %p134 = scmp.ne.s32.totalorder %s123, %s126
      %p135 = scmp.eq.s32.totalorder %s33, 9
      %p136 = por %p134, %p135
      %p137 = scmp.ne.s32.totalorder %s126, %s127
      %p138 = scmp.eq.s32.totalorder %s33, 0
      %p139 = por %p137, %p138
      %p140 = scmp.ne.s32.totalorder %s126, %s127
      %p141 = scmp.eq.s32.totalorder %s34, 9
      %p142 = por %p140, %p141
      %p144 = scmp.ne.s32.totalorder %s127, %s143
      %p145 = scmp.eq.s32.totalorder %s34, 0
      %p146 = por %p144, %p145
      %s147 = ssub.s32 %s35, %s47
      %p148 = scmp.eq.s32.totalorder %s147, 0
      %s150 = sadd.s32 %s149, 1
      %s151 = scalar_select %p148, %s149, %s150
      %p154 = pneg %p148
      %p155 = scmp.eq.s32.totalorder %s28, 9
      %p156 = por %p154, %p155
      %p157 = scmp.ne.s32.totalorder %s149, %s152
      %p158 = scmp.eq.s32.totalorder %s28, 0
      %p159 = por %p157, %p158
      %p160 = scmp.ne.s32.totalorder %s149, %s152
      %p161 = scmp.eq.s32.totalorder %s33, 9
      %p162 = por %p160, %p161
      %p163 = scmp.ne.s32.totalorder %s152, %s153
      %p164 = scmp.eq.s32.totalorder %s33, 0
      %p165 = por %p163, %p164
      %p166 = scmp.ne.s32.totalorder %s152, %s153
      %p167 = scmp.eq.s32.totalorder %s34, 9
      %p168 = por %p166, %p167
      %p170 = scmp.ne.s32.totalorder %s153, %s169
      %p171 = scmp.eq.s32.totalorder %s34, 0
      %p172 = por %p170, %p171
      %s173 = ssub.s32 %s35, %s47
      %p174 = scmp.eq.s32.totalorder %s173, 0
      %s176 = sadd.s32 %s175, 1
      %s177 = scalar_select %p174, %s175, %s176
      %p180 = pneg %p174
      %p181 = scmp.eq.s32.totalorder %s28, 9
      %p182 = por %p180, %p181
      %p183 = scmp.ne.s32.totalorder %s175, %s178
      %p184 = scmp.eq.s32.totalorder %s28, 0
      %p185 = por %p183, %p184
      %p186 = scmp.ne.s32.totalorder %s175, %s178
      %p187 = scmp.eq.s32.totalorder %s33, 9
      %p188 = por %p186, %p187
      %p189 = scmp.ne.s32.totalorder %s178, %s179
      %p190 = scmp.eq.s32.totalorder %s33, 0
      %p191 = por %p189, %p190
      %p192 = scmp.ne.s32.totalorder %s178, %s179
      %p193 = scmp.eq.s32.totalorder %s34, 9
      %p194 = por %p192, %p193
      %p196 = scmp.ne.s32.totalorder %s179, %s195
      %p197 = scmp.eq.s32.totalorder %s34, 0
      %p198 = por %p196, %p197
      %s199 = ssub.s32 %s35, %s47
      %p200 = scmp.eq.s32.totalorder %s199, 0
      %s202 = sadd.s32 %s201, 1
      %s203 = scalar_select %p200, %s201, %s202
      %p206 = pneg %p200
      %p207 = scmp.eq.s32.totalorder %s28, 9
      %p208 = por %p206, %p207
      %p209 = scmp.ne.s32.totalorder %s201, %s204
      %p210 = scmp.eq.s32.totalorder %s28, 0
      %p211 = por %p209, %p210
      %p212 = scmp.ne.s32.totalorder %s201, %s204
      %p213 = scmp.eq.s32.totalorder %s33, 9
      %p214 = por %p212, %p213
      %p215 = scmp.ne.s32.totalorder %s204, %s205
      %p216 = scmp.eq.s32.totalorder %s33, 0
      %p217 = por %p215, %p216
      %p218 = scmp.ne.s32.totalorder %s204, %s205
      %p219 = scmp.eq.s32.totalorder %s34, 9
      %p220 = por %p218, %p219
      %p222 = scmp.ne.s32.totalorder %s205, %s221
      %p223 = scmp.eq.s32.totalorder %s34, 0
      %p224 = por %p222, %p223
      %s225 = ssub.s32 %s35, %s47
      %p226 = scmp.eq.s32.totalorder %s225, 0
      %s228 = sadd.s32 %s227, 1
      %s229 = scalar_select %p226, %s227, %s228
      %p232 = pneg %p226
      %p233 = scmp.eq.s32.totalorder %s28, 9
      %p234 = por %p232, %p233
      %p235 = scmp.ne.s32.totalorder %s227, %s230
      %p236 = scmp.eq.s32.totalorder %s28, 0
      %p237 = por %p235, %p236
      %p238 = scmp.ne.s32.totalorder %s227, %s230
      %p239 = scmp.eq.s32.totalorder %s33, 9
      %p240 = por %p238, %p239
      %p241 = scmp.ne.s32.totalorder %s230, %s231
      %p242 = scmp.eq.s32.totalorder %s33, 0
      %p243 = por %p241, %p242
      %p244 = scmp.ne.s32.totalorder %s230, %s231
      %p245 = scmp.eq.s32.totalorder %s34, 9
      %p246 = por %p244, %p245
      %p248 = scmp.ne.s32.totalorder %s231, %s247
      %p249 = scmp.eq.s32.totalorder %s34, 0
      %p250 = por %p248, %p249
      %s252 = sadd.s32 %s251, 1
      %p255 = scmp.eq.s32.totalorder %s28, 9
      %p256 = scmp.ne.s32.totalorder %s251, %s253
      %p257 = scmp.eq.s32.totalorder %s28, 0
      %p258 = por %p256, %p257
      %p259 = scmp.ne.s32.totalorder %s251, %s253
      %p260 = scmp.eq.s32.totalorder %s33, 9
      %p261 = por %p259, %p260
      %p262 = scmp.ne.s32.totalorder %s253, %s254
      %p263 = scmp.eq.s32.totalorder %s33, 0
      %p264 = por %p262, %p263
      %p265 = scmp.ne.s32.totalorder %s253, %s254
      %p266 = scmp.eq.s32.totalorder %s34, 9
      %p267 = por %p265, %p266
      %p269 = scmp.ne.s32.totalorder %s254, %s268
      %p270 = scmp.eq.s32.totalorder %s34, 0
      %p271 = por %p269, %p270
      %s273 = sadd.s32 %s272, 1
      %p276 = scmp.eq.s32.totalorder %s28, 9
      %p277 = scmp.ne.s32.totalorder %s272, %s274
      %p278 = scmp.eq.s32.totalorder %s28, 0
      %p279 = por %p277, %p278
      %p280 = scmp.ne.s32.totalorder %s272, %s274
      %p281 = scmp.eq.s32.totalorder %s33, 9
      %p282 = por %p280, %p281
      %p283 = scmp.ne.s32.totalorder %s274, %s275
      %p284 = scmp.eq.s32.totalorder %s33, 0
      %p285 = por %p283, %p284
      %p286 = scmp.ne.s32.totalorder %s274, %s275
      %p287 = scmp.eq.s32.totalorder %s34, 9
      %p288 = por %p286, %p287
      %p290 = scmp.ne.s32.totalorder %s275, %s289
      %p291 = scmp.eq.s32.totalorder %s34, 0
      %p292 = por %p290, %p291
      %s294 = sadd.s32 %s293, 1
      %p297 = scmp.eq.s32.totalorder %s28, 9
      %p298 = scmp.ne.s32.totalorder %s293, %s295
      %p299 = scmp.eq.s32.totalorder %s28, 0
      %p300 = por %p298, %p299
      %p301 = scmp.ne.s32.totalorder %s293, %s295
      %p302 = scmp.eq.s32.totalorder %s33, 9
      %p303 = por %p301, %p302
      %p304 = scmp.ne.s32.totalorder %s295, %s296
      %p305 = scmp.eq.s32.totalorder %s33, 0
      %p306 = por %p304, %p305
      %p307 = scmp.ne.s32.totalorder %s295, %s296
      %p308 = scmp.eq.s32.totalorder %s34, 9
      %p309 = por %p307, %p308
      %p311 = scmp.ne.s32.totalorder %s296, %s310
      %p312 = scmp.eq.s32.totalorder %s34, 0
      %p313 = por %p311, %p312
      %s315 = sadd.s32 %s314, 1
      %p318 = scmp.eq.s32.totalorder %s28, 9
      %p319 = scmp.ne.s32.totalorder %s314, %s316
      %p320 = scmp.eq.s32.totalorder %s28, 0
      %p321 = por %p319, %p320
      %p322 = scmp.ne.s32.totalorder %s314, %s316
      %p323 = scmp.eq.s32.totalorder %s33, 9
      %p324 = por %p322, %p323
      %p325 = scmp.ne.s32.totalorder %s316, %s317
      %p326 = scmp.eq.s32.totalorder %s33, 0
      %p327 = por %p325, %p326
      %p328 = scmp.ne.s32.totalorder %s316, %s317
      %p329 = scmp.eq.s32.totalorder %s34, 9
      %p330 = por %p328, %p329
      %p332 = scmp.ne.s32.totalorder %s317, %s331
      %p333 = scmp.eq.s32.totalorder %s34, 0
      %p334 = por %p332, %p333
      %s336 = sadd.s32 %s335, 1
      %p339 = scmp.eq.s32.totalorder %s28, 9
      %p340 = scmp.ne.s32.totalorder %s335, %s337
      %p341 = scmp.eq.s32.totalorder %s28, 0
      %p342 = por %p340, %p341
      %p343 = scmp.ne.s32.totalorder %s335, %s337
      %p344 = scmp.eq.s32.totalorder %s33, 9
      %p345 = por %p343, %p344
      %p346 = scmp.ne.s32.totalorder %s337, %s338
      %p347 = scmp.eq.s32.totalorder %s33, 0
      %p348 = por %p346, %p347
      %p349 = scmp.ne.s32.totalorder %s337, %s338
      %p350 = scmp.eq.s32.totalorder %s34, 9
      %p351 = por %p349, %p350
      %p353 = scmp.ne.s32.totalorder %s338, %s352
      %p354 = scmp.eq.s32.totalorder %s34, 0
      %p355 = por %p353, %p354
      %s357 = sadd.s32 %s356, 1
      %p360 = scmp.eq.s32.totalorder %s28, 9
      %p361 = scmp.ne.s32.totalorder %s356, %s358
      %p362 = scmp.eq.s32.totalorder %s28, 0
      %p363 = por %p361, %p362
      %p364 = scmp.ne.s32.totalorder %s356, %s358
      %p365 = scmp.eq.s32.totalorder %s33, 9
      %p366 = por %p364, %p365
      %p367 = scmp.ne.s32.totalorder %s358, %s359
      %p368 = scmp.eq.s32.totalorder %s33, 0
      %p369 = por %p367, %p368
      %p370 = scmp.ne.s32.totalorder %s358, %s359
      %p371 = scmp.eq.s32.totalorder %s34, 9
      %p372 = por %p370, %p371
      %p374 = scmp.ne.s32.totalorder %s359, %s373
      %p375 = scmp.eq.s32.totalorder %s34, 0
      %p376 = por %p374, %p375
      %p377 = scmp.le.s32.totalorder 1, %s28
      %p378 = scmp.lt.s32.totalorder %s28, 11
      %p379 = pnand %p377, %p378
      %p380 = pneg %p379
      // Predicated region
      $region9: #{tpu_custom_call.1} parent=5 // pred_check
        _
      $region10: #{tpu_custom_call.1} parent=5 // pred_check_branch
        %382 = sbr.rel (%p379) target = $region12
      $region11: #{tpu_custom_call.1} parent=5 // pred_region
        %s383 = ssub.s32 %s28, 1
        // Predicated region
        $region13: #{tpu_custom_call.1} parent=11 // pred_check
          %p384 = pneg %p61
        $region14: #{tpu_custom_call.1} parent=11 // pred_check_branch
          %386 = sbr.rel (%p384) target = $region16
        $region15: #{tpu_custom_call.1} parent=11 // pred_region
          %388 = vsyncadd [#allocation7], 0
          %s389 = sshll.u32 %s0, 4
          %s390 = int_to_ptr.hbm [resolvable:$true] %s389
          %s391 = sshll.u32 [#allocation6], 4
          %s392 = int_to_ptr.vmem [resolvable:$true] %s391
          %397 = dma.hbm_to_vmem [thread:$0]  %s390, 1024, %s392, [#allocation7], 256, 256, 16
        $region16: #{tpu_custom_call.1} parent=11 // pred_fallthru
          _
        // Predicated region
        $region17: #{tpu_custom_call.1} parent=11 // pred_check
          %p398 = pneg %p264
        $region18: #{tpu_custom_call.1} parent=11 // pred_check_branch
          %400 = sbr.rel (%p398) target = $region20
        $region19: #{tpu_custom_call.1} parent=11 // pred_region
          _
        $region20: #{tpu_custom_call.1} parent=11 // pred_fallthru
          _
        // Predicated region
        $region21: #{tpu_custom_call.1} parent=11 // pred_check
          %p401 = pneg %p285
        $region22: #{tpu_custom_call.1} parent=11 // pred_check_branch
          %403 = sbr.rel (%p401) target = $region24
        $region23: #{tpu_custom_call.1} parent=11 // pred_region
          _
        $region24: #{tpu_custom_call.1} parent=11 // pred_fallthru
          _
        // Predicated region
        $region25: #{tpu_custom_call.1} parent=11 // pred_check
          %p404 = pneg %p306
        $region26: #{tpu_custom_call.1} parent=11 // pred_check_branch
          %406 = sbr.rel (%p404) target = $region28
        $region27: #{tpu_custom_call.1} parent=11 // pred_region
          _
        $region28: #{tpu_custom_call.1} parent=11 // pred_fallthru
          _
        // Predicated region
        $region29: #{tpu_custom_call.1} parent=11 // pred_check
          %p407 = pneg %p327
        $region30: #{tpu_custom_call.1} parent=11 // pred_check_branch
          %409 = sbr.rel (%p407) target = $region32
        $region31: #{tpu_custom_call.1} parent=11 // pred_region
          _
        $region32: #{tpu_custom_call.1} parent=11 // pred_fallthru
          _
        // Predicated region
        $region33: #{tpu_custom_call.1} parent=11 // pred_check
          %p410 = pneg %p348
        $region34: #{tpu_custom_call.1} parent=11 // pred_check_branch
          %412 = sbr.rel (%p410) target = $region36
        $region35: #{tpu_custom_call.1} parent=11 // pred_region
          _
        $region36: #{tpu_custom_call.1} parent=11 // pred_fallthru
          _
      $region12: #{tpu_custom_call.1} parent=5 // pred_fallthru
        _
      %p413 = scmp.lt.s32.totalorder %s28, 10
      // Predicated region
      $region37: #{tpu_custom_call.1} parent=5 // pred_check
        %p414 = pneg %p413
      $region38: #{tpu_custom_call.1} parent=5 // pred_check_branch
        %416 = sbr.rel (%p414) target = $region40
      $region39: #{tpu_custom_call.1} parent=5 // pred_region
        // Predicated region
        $region41: #{tpu_custom_call.1} parent=39 // pred_check
          %p417 = pneg %p81
        $region42: #{tpu_custom_call.1} parent=39 // pred_check_branch
          %419 = sbr.rel (%p417) target = $region44
        $region43: #{tpu_custom_call.1} parent=39 // pred_region
          %s420 = smul.u32 16, %s36
          %p421 = scmp.lt.s32.totalorder %s420, 31
          %s422 = scalar_select %p421, %s420, 31
          %s423 = smul.addr %s422, 4
          %s424 = scalar_lea.vmem %s1, %s423
          %s425 = smul.u32 16, %s36
        $region44: #{tpu_custom_call.1} parent=39 // pred_fallthru
          _
        // Predicated region
        $region45: #{tpu_custom_call.1} parent=39 // pred_check
          %p426 = pneg %p107
        $region46: #{tpu_custom_call.1} parent=39 // pred_check_branch
          %428 = sbr.rel (%p426) target = $region48
        $region47: #{tpu_custom_call.1} parent=39 // pred_region
          %s429 = smul.u32 16, %s36
          %p430 = scmp.lt.s32.totalorder %s429, 31
          %s431 = scalar_select %p430, %s429, 31
          %s432 = smul.addr %s431, 4
          %s433 = scalar_lea.vmem %s2, %s432
          %s434 = smul.u32 16, %s36
        $region48: #{tpu_custom_call.1} parent=39 // pred_fallthru
          _
        // Predicated region
        $region49: #{tpu_custom_call.1} parent=39 // pred_check
          %p435 = pneg %p133
        $region50: #{tpu_custom_call.1} parent=39 // pred_check_branch
          %437 = sbr.rel (%p435) target = $region52
        $region51: #{tpu_custom_call.1} parent=39 // pred_region
          %s438 = sand.u32 %s28, 1
          %s439 = scalar_lea.sflag [#allocation9], %s438
          %s440 = sand.u32 %s123, 1
          %s441 = smul.addr %s440, 16
          %s442 = scalar_lea.vmem [#allocation8], %s441
          %444 = vsyncadd %s439, 0
          %s445 = smul.addr %s36, 4
          %s446 = scalar_lea.hbm %s3, %s445
          %s447 = sshll.u32 %s446, 4
          %s448 = int_to_ptr.hbm [resolvable:$true] %s447
          %s449 = sshll.u32 %s442, 4
          %s450 = int_to_ptr.vmem [resolvable:$true] %s449
          %455 = dma.hbm_to_vmem [thread:$0]  %s448, 256, %s450, %s439, 128, 64, 4
        $region52: #{tpu_custom_call.1} parent=39 // pred_fallthru
          _
        // Predicated region
        $region53: #{tpu_custom_call.1} parent=39 // pred_check
          %p456 = pneg %p159
        $region54: #{tpu_custom_call.1} parent=39 // pred_check_branch
          %458 = sbr.rel (%p456) target = $region56
        $region55: #{tpu_custom_call.1} parent=39 // pred_region
          %p459 = scmp.lt.s32.totalorder %s35, 4
          %s460 = scalar_select %p459, %s35, 4
          %s461 = smul.addr %s460, 8
          %s462 = smul.addr %s461, 4
          %s463 = scalar_lea.vmem %s4, %s462
        $region56: #{tpu_custom_call.1} parent=39 // pred_fallthru
          _
        // Predicated region
        $region57: #{tpu_custom_call.1} parent=39 // pred_check
          %p464 = pneg %p185
        $region58: #{tpu_custom_call.1} parent=39 // pred_check_branch
          %466 = sbr.rel (%p464) target = $region60
        $region59: #{tpu_custom_call.1} parent=39 // pred_region
          %s467 = sand.u32 %s28, 1
          %s468 = scalar_lea.sflag [#allocation9], %s467
          %s469 = sand.u32 %s175, 1
          %s470 = smul.addr %s469, 2
          %s471 = scalar_lea.vmem [#allocation10], %s470
          %473 = vsyncadd %s468, 0
          %s474 = smul.addr %s35, 2
          %s475 = scalar_lea.hbm %s5, %s474
          %s477 = sshll.u32 %s475, 4
          %s478 = int_to_ptr.hbm [resolvable:$true] %s477
          %s479 = sshll.u32 %s471, 4
          %s480 = int_to_ptr.vmem [resolvable:$true] %s479
          %482 = dma.hbm_to_vmem [thread:$0]  %s478, 32, %s480, %s468
        $region60: #{tpu_custom_call.1} parent=39 // pred_fallthru
          _
        // Predicated region
        $region61: #{tpu_custom_call.1} parent=39 // pred_check
          %p483 = pneg %p211
        $region62: #{tpu_custom_call.1} parent=39 // pred_check_branch
          %485 = sbr.rel (%p483) target = $region64
        $region63: #{tpu_custom_call.1} parent=39 // pred_region
          %s486 = sand.u32 %s28, 1
          %s487 = scalar_lea.sflag [#allocation12], %s486
          %s488 = sand.u32 %s201, 1
          %s489 = smul.addr %s488, 256
          %s490 = scalar_lea.vmem [#allocation11], %s489
          %492 = vsyncadd %s487, 0
          %s493 = smul.addr %s35, 64
          %s494 = smul.addr %s493, 4
          %s495 = scalar_lea.hbm %s6, %s494
          %s496 = sshll.u32 %s495, 4
          %s497 = int_to_ptr.hbm [resolvable:$true] %s496
          %s498 = sshll.u32 %s490, 4
          %s499 = int_to_ptr.vmem [resolvable:$true] %s498
          %504 = dma.hbm_to_vmem [thread:$0]  %s497, 4096, %s499, %s487, 128, 128, 8
        $region64: #{tpu_custom_call.1} parent=39 // pred_fallthru
          _
        // Predicated region
        $region65: #{tpu_custom_call.1} parent=39 // pred_check
          %p505 = pneg %p237
        $region66: #{tpu_custom_call.1} parent=39 // pred_check_branch
          %507 = sbr.rel (%p505) target = $region68
        $region67: #{tpu_custom_call.1} parent=39 // pred_region
          %s508 = sand.u32 %s28, 1
          %s509 = scalar_lea.sflag [#allocation12], %s508
          %s510 = sand.u32 %s227, 1
          %s511 = smul.addr %s510, 2
          %s512 = scalar_lea.vmem [#allocation13], %s511
          %514 = vsyncadd %s509, 0
          %s515 = smul.addr %s35, 2
          %s516 = scalar_lea.hbm %s7, %s515
          %s518 = sshll.u32 %s516, 4
          %s519 = int_to_ptr.hbm [resolvable:$true] %s518
          %s520 = sshll.u32 %s512, 4
          %s521 = int_to_ptr.vmem [resolvable:$true] %s520
          %523 = dma.hbm_to_vmem [thread:$0]  %s519, 32, %s521, %s509
        $region68: #{tpu_custom_call.1} parent=39 // pred_fallthru
          _
      $region40: #{tpu_custom_call.1} parent=5 // pred_fallthru
        _
      %p524 = scmp.le.s32.totalorder 1, %s28
      %p525 = scmp.lt.s32.totalorder %s28, 11
      %p526 = pnand %p524, %p525
      %p527 = pneg %p526
      // Predicated region
      $region69: #{tpu_custom_call.1} parent=5 // pred_check
        _
      $region70: #{tpu_custom_call.1} parent=5 // pred_check_branch
        %529 = sbr.rel (%p526) target = $region72
      $region71: #{tpu_custom_call.1} parent=5 // pred_region
        %s530 = ssub.s32 %s28, 1
        // Predicated region
        $region73: #{tpu_custom_call.1} parent=71 // pred_check
          %p531 = pneg %p61
        $region74: #{tpu_custom_call.1} parent=71 // pred_check_branch
          %533 = sbr.rel (%p531) target = $region76
        $region75: #{tpu_custom_call.1} parent=71 // pred_region
          %535 = dma.done [#allocation7], 1024
        $region76: #{tpu_custom_call.1} parent=71 // pred_fallthru
          _
        %s536 = sand.u32 %s33, 1
        %s537 = scalar_lea.sflag [#allocation9], %s536
        %s538 = sand.u32 %s126, 1
        %s539 = smul.addr %s538, 16
        %s540 = scalar_lea.vmem [#allocation8], %s539
        // Predicated region
        $region77: #{tpu_custom_call.1} parent=71 // pred_check
          %p541 = pneg %p139
        $region78: #{tpu_custom_call.1} parent=71 // pred_check_branch
          %543 = sbr.rel (%p541) target = $region80
        $region79: #{tpu_custom_call.1} parent=71 // pred_region
          %545 = dma.done %s537, 256
        $region80: #{tpu_custom_call.1} parent=71 // pred_fallthru
          _
        %s546 = sand.u32 %s33, 1
        %s547 = scalar_lea.sflag [#allocation9], %s546
        %s548 = sand.u32 %s178, 1
        %s549 = smul.addr %s548, 2
        %s550 = scalar_lea.vmem [#allocation10], %s549
        // Predicated region
        $region81: #{tpu_custom_call.1} parent=71 // pred_check
          %p551 = pneg %p191
        $region82: #{tpu_custom_call.1} parent=71 // pred_check_branch
          %553 = sbr.rel (%p551) target = $region84
        $region83: #{tpu_custom_call.1} parent=71 // pred_region
          %555 = dma.done %s547, 32
        $region84: #{tpu_custom_call.1} parent=71 // pred_fallthru
          _
        %s556 = sand.u32 %s33, 1
        %s557 = scalar_lea.sflag [#allocation12], %s556
        %s558 = sand.u32 %s204, 1
        %s559 = smul.addr %s558, 256
        %s560 = scalar_lea.vmem [#allocation11], %s559
        // Predicated region
        $region85: #{tpu_custom_call.1} parent=71 // pred_check
          %p561 = pneg %p217
        $region86: #{tpu_custom_call.1} parent=71 // pred_check_branch
          %563 = sbr.rel (%p561) target = $region88
        $region87: #{tpu_custom_call.1} parent=71 // pred_region
          %565 = dma.done %s557, 4096
        $region88: #{tpu_custom_call.1} parent=71 // pred_fallthru
          _
        %s566 = sand.u32 %s33, 1
        %s567 = scalar_lea.sflag [#allocation12], %s566
        %s568 = sand.u32 %s230, 1
        %s569 = smul.addr %s568, 2
        %s570 = scalar_lea.vmem [#allocation13], %s569
        // Predicated region
        $region89: #{tpu_custom_call.1} parent=71 // pred_check
          %p571 = pneg %p243
        $region90: #{tpu_custom_call.1} parent=71 // pred_check_branch
          %573 = sbr.rel (%p571) target = $region92
        $region91: #{tpu_custom_call.1} parent=71 // pred_region
          %575 = dma.done %s567, 32
        $region92: #{tpu_custom_call.1} parent=71 // pred_fallthru
          _
        %p576 = pneg %p61
        %p577 = pneg %p58
        %s578 = smul.u32 16, %s38
        %p579 = scmp.lt.s32.totalorder %s578, 31
        %s580 = scalar_select %p579, %s578, 31
        %s581 = smul.addr %s580, 4
        %s582 = scalar_lea.vmem %s1, %s581
        %p583 = pneg %p87
        %p584 = pneg %p84
        %s585 = smul.u32 16, %s38
        %p586 = scmp.lt.s32.totalorder %s585, 31
        %s587 = scalar_select %p586, %s585, 31
        %s588 = smul.addr %s587, 4
        %s589 = scalar_lea.vmem %s2, %s588
        %p590 = pneg %p113
        %p591 = pneg %p110
        %s592 = sand.u32 %s33, 1
        %s593 = scalar_lea.sflag [#allocation9], %s592
        %s594 = sand.u32 %s126, 1
        %s595 = smul.addr %s594, 16
        %s596 = scalar_lea.vmem [#allocation8], %s595
        %p597 = pneg %p139
        %p598 = pneg %p136
        %p599 = scmp.lt.s32.totalorder %s37, 4
        %s600 = scalar_select %p599, %s37, 4
        %s601 = smul.addr %s600, 8
        %s602 = smul.addr %s601, 4
        %s603 = scalar_lea.vmem %s4, %s602
        %p604 = pneg %p165
        %p605 = pneg %p162
        %s606 = sand.u32 %s33, 1
        %s607 = scalar_lea.sflag [#allocation9], %s606
        %s608 = sand.u32 %s178, 1
        %s609 = smul.addr %s608, 2
        %s610 = scalar_lea.vmem [#allocation10], %s609
        %p611 = pneg %p191
        %p612 = pneg %p188
        %s613 = sand.u32 %s33, 1
        %s614 = scalar_lea.sflag [#allocation12], %s613
        %s615 = sand.u32 %s204, 1
        %s616 = smul.addr %s615, 256
        %s617 = scalar_lea.vmem [#allocation11], %s616
        %p618 = pneg %p217
        %p619 = pneg %p214
        %s620 = sand.u32 %s33, 1
        %s621 = scalar_lea.sflag [#allocation12], %s620
        %s622 = sand.u32 %s230, 1
        %s623 = smul.addr %s622, 2
        %s624 = scalar_lea.vmem [#allocation13], %s623
        %p625 = pneg %p243
        %p626 = pneg %p240
        %p627 = pneg %p264
        %p628 = pneg %p261
        %p629 = pneg %p285
        %p630 = pneg %p282
        %p631 = pneg %p306
        %p632 = pneg %p303
        %p633 = pneg %p327
        %p634 = pneg %p324
        %p635 = pneg %p348
        %p636 = pneg %p345
        %p637 = pneg %p369
        %p638 = pneg %p366
        %s639 = smul.u32 16, %s38
        %p640 = scmp.lt.s32.totalorder %s639, 31
        %s641 = scalar_select %p640, %s639, 31
        %s642 = smul.addr %s641, 4
        %s643 = scalar_lea.vmem %s1, %s642
        %s644 = smul.u32 16, %s38
        %s645 = smul.u32 16, %s38
        %p646 = scmp.lt.s32.totalorder %s645, 31
        %s647 = scalar_select %p646, %s645, 31
        %s648 = smul.addr %s647, 4
        %s649 = scalar_lea.vmem %s2, %s648
        %s650 = smul.u32 16, %s38
        %p651 = scmp.lt.s32.totalorder %s37, 4
        %s652 = scalar_select %p651, %s37, 4
        %s653 = smul.addr %s652, 8
        %s654 = smul.addr %s653, 4
        %s655 = scalar_lea.vmem %s4, %s654
        %p657 = scmp.eq.s32.totalorder %s37, 0
        %p658 = scmp.eq.s32.totalorder %s38, 0
        %p659 = pnand %p657, %p658
        %p660 = pneg %p659
        // Predicated region
        $region93: #{tpu_custom_call.1} parent=71 // pred_check
          _
        $region94: #{tpu_custom_call.1} parent=71 // pred_check_branch
          %662 = sbr.rel (%p659) target = $region96
        $region95: #{tpu_custom_call.1} parent=71 // pred_region
          %v663 = vld [vmem:[#allocation6] sm:$0xff]
          %v664 = vld [vmem:[#allocation6 + $0x8] sm:$0xff]
          %v665 = vld [vmem:[#allocation6 + $0x10] sm:$0xff]
          %v666 = vld [vmem:[#allocation6 + $0x18] sm:$0xff]
          %v667 = vld [vmem:[#allocation6 + $0x20] sm:$0xff]
          %v668 = vld [vmem:[#allocation6 + $0x28] sm:$0xff]
          %v669 = vld [vmem:[#allocation6 + $0x30] sm:$0xff]
          %v670 = vld [vmem:[#allocation6 + $0x38] sm:$0xff]
          %671 = vst [vmem:[#allocation2] sm:$0xff] %v663
          %672 = vst [vmem:[#allocation2 + $0x8] sm:$0xff] %v664
          %673 = vst [vmem:[#allocation2 + $0x10] sm:$0xff] %v665
          %674 = vst [vmem:[#allocation2 + $0x18] sm:$0xff] %v666
          %675 = vst [vmem:[#allocation2 + $0x20] sm:$0xff] %v667
          %676 = vst [vmem:[#allocation2 + $0x28] sm:$0xff] %v668
          %677 = vst [vmem:[#allocation2 + $0x30] sm:$0xff] %v669
          %678 = vst [vmem:[#allocation2 + $0x38] sm:$0xff] %v670
          %v679 = vpack.c.bf16 %v664, %v663
          %v680 = vpack.c.bf16 %v666, %v665
          %v681 = vpack.c.bf16 %v668, %v667
          %v682 = vpack.c.bf16 %v670, %v669
          %683 = vst [vmem:[#allocation3] sm:$0xff] %v679
          %684 = vst [vmem:[#allocation3 + $0x8] sm:$0xff] %v680
          %685 = vst [vmem:[#allocation3 + $0x10] sm:$0xff] %v681
          %686 = vst [vmem:[#allocation3 + $0x18] sm:$0xff] %v682
        $region96: #{tpu_custom_call.1} parent=71 // pred_fallthru
          _
        %v687 = vld [vmem:[%s643] sm:$0xf]
        %v688 = vld [vmem:[%s643 + $0x4] sm:$0xf]
        %v689 = vld [vmem:[%s643 + $0x8] sm:$0xf]
        %v690 = vld [vmem:[%s643 + $0xc] sm:$0xf]
        %v691 = vld [vmem:[%s643 + $0x10] sm:$0xf]
        %v692 = vld [vmem:[%s643 + $0x14] sm:$0xf]
        %v693 = vld [vmem:[%s643 + $0x18] sm:$0xf]
        %v694 = vld [vmem:[%s643 + $0x1c] sm:$0xf]
        %v695 = vld [vmem:[%s643 + $0x20] sm:$0xf]
        %v696 = vld [vmem:[%s643 + $0x24] sm:$0xf]
        %v697 = vld [vmem:[%s643 + $0x28] sm:$0xf]
        %v698 = vld [vmem:[%s643 + $0x2c] sm:$0xf]
        %v699 = vld [vmem:[%s643 + $0x30] sm:$0xf]
        %v700 = vld [vmem:[%s643 + $0x34] sm:$0xf]
        %v701 = vld [vmem:[%s643 + $0x38] sm:$0xf]
        %v702 = vld [vmem:[%s643 + $0x3c] sm:$0xf]
        %v703 = vld [vmem:[%s655] sm:$0xff]
        %v704 = vld [vmem:[%s655 + $0x8] sm:$0xff]
        %v705 = vld [vmem:[%s655 + $0x10] sm:$0xff]
        %v706 = vld [vmem:[%s655 + $0x18] sm:$0xff]
        %v707 = vld [vmem:[%s550] sm:$0x3]
        %v709 = vperm.slane %v707, 0
        %v710 = vperm.slane %v707, 1
        %v729 = vunpack.c.l.b16 %v687
        %v730 = vunpack.c.l.b16 %v688
        %v731 = vunpack.c.l.b16 %v689
        %v732 = vunpack.c.l.b16 %v690
        %v733 = vunpack.c.l.b16 %v691
        %v734 = vunpack.c.l.b16 %v692
        %v735 = vunpack.c.l.b16 %v693
        %v736 = vunpack.c.l.b16 %v694
        %v737 = vunpack.c.l.b16 %v695
        %v738 = vunpack.c.l.b16 %v696
        %v739 = vunpack.c.l.b16 %v697
        %v740 = vunpack.c.l.b16 %v698
        %v741 = vunpack.c.l.b16 %v699
        %v742 = vunpack.c.l.b16 %v700
        %v743 = vunpack.c.l.b16 %v701
        %v744 = vunpack.c.l.b16 %v702
        %v745 = vpack.c.b16 %v730, %v729
        %v746 = vpack.c.b16 %v732, %v731
        %v747 = vpack.c.b16 %v734, %v733
        %v748 = vpack.c.b16 %v736, %v735
        %v749 = vpack.c.b16 %v738, %v737
        %v750 = vpack.c.b16 %v740, %v739
        %v751 = vpack.c.b16 %v742, %v741
        %v752 = vpack.c.b16 %v744, %v743
        %v757 = vunpack.c.l.b16 %v703
        %v758 = vunpack.c.h.b16 %v703
        %v759 = vunpack.c.l.b16 %v704
        %v760 = vunpack.c.h.b16 %v704
        %v761 = vunpack.c.l.b16 %v705
        %v762 = vunpack.c.h.b16 %v705
        %v763 = vunpack.c.l.b16 %v706
        %v764 = vunpack.c.h.b16 %v706
        %v765 = vpack.c.b16 %v759, %v757
        %v766 = vpack.c.b16 %v760, %v758
        %v767 = vpack.c.b16 %v763, %v761
        %v768 = vpack.c.b16 %v764, %v762
        %vm773 = vcmask 261120
        %v775 = vsel %vm773, %v745, 0
        %v778 = vsel %vm773, %v746, 0
        %v781 = vsel %vm773, %v747, 0
        %v784 = vsel %vm773, %v748, 0
        %v787 = vsel %vm773, %v749, 0
        %v790 = vsel %vm773, %v750, 0
        %v793 = vsel %vm773, %v751, 0
        %v796 = vsel %vm773, %v752, 0
        %798 = vmatpush.bf16.msra.mxu0 0
        %799 = vmatpush.bf16.msra.mxu0 0
        %800 = vmatpush.bf16.msra.mxu0 0
        %801 = vmatpush.bf16.msra.mxu0 0
        %802 = vmatpush.bf16.msra.mxu0 0
        %803 = vmatpush.bf16.msra.mxu0 0
        %804 = vmatpush.bf16.msra.mxu0 %v767
        %805 = vmatpush.bf16.msra.mxu0 %v765
        %806 = vmatmul.bf16.gmra.mxu0 %v775
        %v807 = vpop.f32.mrf.mxu0
        %v808 = vadd.f32 %v709, %v807
        %v809 = vpop.f32.mrf.mxu0
        %v810 = vadd.f32 %v709, %v809
        %811 = vmatmul.bf16.gmra.mxu0 %v778
        %v812 = vpop.f32.mrf.mxu0
        %v813 = vadd.f32 %v709, %v812
        %v814 = vpop.f32.mrf.mxu0
        %v815 = vadd.f32 %v709, %v814
        %816 = vmatmul.bf16.gmra.mxu0 %v781
        %v817 = vpop.f32.mrf.mxu0
        %v818 = vadd.f32 %v709, %v817
        %v819 = vpop.f32.mrf.mxu0
        %v820 = vadd.f32 %v709, %v819
        %821 = vmatmul.bf16.gmra.mxu0 %v784
        %v822 = vpop.f32.mrf.mxu0
        %v823 = vadd.f32 %v709, %v822
        %v824 = vpop.f32.mrf.mxu0
        %v825 = vadd.f32 %v709, %v824
        %826 = vmatmul.bf16.gmra.mxu0 %v787
        %v827 = vpop.f32.mrf.mxu0
        %v828 = vadd.f32 %v709, %v827
        %v829 = vpop.f32.mrf.mxu0
        %v830 = vadd.f32 %v709, %v829
        %831 = vmatmul.bf16.gmra.mxu0 %v790
        %v832 = vpop.f32.mrf.mxu0
        %v833 = vadd.f32 %v709, %v832
        %v834 = vpop.f32.mrf.mxu0
        %v835 = vadd.f32 %v709, %v834
        %836 = vmatmul.bf16.gmra.mxu0 %v793
        %v837 = vpop.f32.mrf.mxu0
        %v838 = vadd.f32 %v709, %v837
        %v839 = vpop.f32.mrf.mxu0
        %v840 = vadd.f32 %v709, %v839
        %841 = vmatmul.bf16.gmra.mxu0 %v796
        %v842 = vpop.f32.mrf.mxu0
        %v843 = vadd.f32 %v709, %v842
        %v844 = vpop.f32.mrf.mxu0
        %v845 = vadd.f32 %v709, %v844
        %846 = vdwg.mxu0
        %847 = vmatpush.bf16.msra.mxu0 0
        %848 = vmatpush.bf16.msra.mxu0 0
        %849 = vmatpush.bf16.msra.mxu0 0
        %850 = vmatpush.bf16.msra.mxu0 0
        %851 = vmatpush.bf16.msra.mxu0 0
        %852 = vmatpush.bf16.msra.mxu0 0
        %853 = vmatpush.bf16.msra.mxu0 %v768
        %854 = vmatpush.bf16.msra.mxu0 %v766
        %855 = vmatmul.bf16.gmra.mxu0 %v775
        %v856 = vpop.f32.mrf.mxu0
        %v857 = vadd.f32 %v710, %v856
        %v858 = vpop.f32.mrf.mxu0
        %v859 = vadd.f32 %v710, %v858
        %860 = vmatmul.bf16.gmra.mxu0 %v778
        %v861 = vpop.f32.mrf.mxu0
        %v862 = vadd.f32 %v710, %v861
        %v863 = vpop.f32.mrf.mxu0
        %v864 = vadd.f32 %v710, %v863
        %865 = vmatmul.bf16.gmra.mxu0 %v781
        %v866 = vpop.f32.mrf.mxu0
        %v867 = vadd.f32 %v710, %v866
        %v868 = vpop.f32.mrf.mxu0
        %v869 = vadd.f32 %v710, %v868
        %870 = vmatmul.bf16.gmra.mxu0 %v784
        %v871 = vpop.f32.mrf.mxu0
        %v872 = vadd.f32 %v710, %v871
        %v873 = vpop.f32.mrf.mxu0
        %v874 = vadd.f32 %v710, %v873
        %875 = vmatmul.bf16.gmra.mxu0 %v787
        %v876 = vpop.f32.mrf.mxu0
        %v877 = vadd.f32 %v710, %v876
        %v878 = vpop.f32.mrf.mxu0
        %v879 = vadd.f32 %v710, %v878
        %880 = vmatmul.bf16.gmra.mxu0 %v790
        %v881 = vpop.f32.mrf.mxu0
        %v882 = vadd.f32 %v710, %v881
        %v883 = vpop.f32.mrf.mxu0
        %v884 = vadd.f32 %v710, %v883
        %885 = vmatmul.bf16.gmra.mxu0 %v793
        %v886 = vpop.f32.mrf.mxu0
        %v887 = vadd.f32 %v710, %v886
        %v888 = vpop.f32.mrf.mxu0
        %v889 = vadd.f32 %v710, %v888
        %890 = vmatmul.bf16.gmra.mxu0 %v796
        %v891 = vpop.f32.mrf.mxu0
        %v892 = vadd.f32 %v710, %v891
        %v893 = vpop.f32.mrf.mxu0
        %v894 = vadd.f32 %v710, %v893
        %895 = vdwg.mxu0
        %v896 = vld [vmem:[%s649] sm:$0xf]
        %v897 = vld [vmem:[%s649 + $0x4] sm:$0xf]
        %v898 = vld [vmem:[%s649 + $0x8] sm:$0xf]
        %v899 = vld [vmem:[%s649 + $0xc] sm:$0xf]
        %v900 = vld [vmem:[%s649 + $0x10] sm:$0xf]
        %v901 = vld [vmem:[%s649 + $0x14] sm:$0xf]
        %v902 = vld [vmem:[%s649 + $0x18] sm:$0xf]
        %v903 = vld [vmem:[%s649 + $0x1c] sm:$0xf]
        %v904 = vld [vmem:[%s649 + $0x20] sm:$0xf]
        %v905 = vld [vmem:[%s649 + $0x24] sm:$0xf]
        %v906 = vld [vmem:[%s649 + $0x28] sm:$0xf]
        %v907 = vld [vmem:[%s649 + $0x2c] sm:$0xf]
        %v908 = vld [vmem:[%s649 + $0x30] sm:$0xf]
        %v909 = vld [vmem:[%s649 + $0x34] sm:$0xf]
        %v910 = vld [vmem:[%s649 + $0x38] sm:$0xf]
        %v911 = vld [vmem:[%s649 + $0x3c] sm:$0xf]
        %v912 = vld [vmem:[#allocation3] sm:$0xff]
        %v913 = vld [vmem:[#allocation3 + $0x8] sm:$0xff]
        %v914 = vld [vmem:[#allocation3 + $0x10] sm:$0xff]
        %v915 = vld [vmem:[#allocation3 + $0x18] sm:$0xff]
        %v932 = vunpack.c.l.b16 %v896
        %v933 = vunpack.c.l.b16 %v897
        %v934 = vunpack.c.l.b16 %v898
        %v935 = vunpack.c.l.b16 %v899
        %v936 = vunpack.c.l.b16 %v900
        %v937 = vunpack.c.l.b16 %v901
        %v938 = vunpack.c.l.b16 %v902
        %v939 = vunpack.c.l.b16 %v903
        %v940 = vunpack.c.l.b16 %v904
        %v941 = vunpack.c.l.b16 %v905
        %v942 = vunpack.c.l.b16 %v906
        %v943 = vunpack.c.l.b16 %v907
        %v944 = vunpack.c.l.b16 %v908
        %v945 = vunpack.c.l.b16 %v909
        %v946 = vunpack.c.l.b16 %v910
        %v947 = vunpack.c.l.b16 %v911
        %v948 = vpack.c.b16 %v933, %v932
        %v949 = vpack.c.b16 %v935, %v934
        %v950 = vpack.c.b16 %v937, %v936
        %v951 = vpack.c.b16 %v939, %v938
        %v952 = vpack.c.b16 %v941, %v940
        %v953 = vpack.c.b16 %v943, %v942
        %v954 = vpack.c.b16 %v945, %v944
        %v955 = vpack.c.b16 %v947, %v946
        %v960 = vunpack.c.l.b16 %v912
        %v961 = vunpack.c.h.b16 %v912
        %v962 = vunpack.c.l.b16 %v913
        %v963 = vunpack.c.h.b16 %v913
        %v964 = vunpack.c.l.b16 %v914
        %v965 = vunpack.c.h.b16 %v914
        %v966 = vunpack.c.l.b16 %v915
        %v967 = vunpack.c.h.b16 %v915
        %v968 = vpack.c.b16 %v962, %v960
        %v969 = vpack.c.b16 %v963, %v961
        %v970 = vpack.c.b16 %v966, %v964
        %v971 = vpack.c.b16 %v967, %v965
        %v977 = vsel %vm773, %v948, 0
        %v980 = vsel %vm773, %v949, 0
        %v983 = vsel %vm773, %v950, 0
        %v986 = vsel %vm773, %v951, 0
        %v989 = vsel %vm773, %v952, 0
        %v992 = vsel %vm773, %v953, 0
        %v995 = vsel %vm773, %v954, 0
        %v998 = vsel %vm773, %v955, 0
        %1000 = vmatpush.bf16.msra.mxu0 0
        %1001 = vmatpush.bf16.msra.mxu0 0
        %1002 = vmatpush.bf16.msra.mxu0 0
        %1003 = vmatpush.bf16.msra.mxu0 0
        %1004 = vmatpush.bf16.msra.mxu0 0
        %1005 = vmatpush.bf16.msra.mxu0 0
        %1006 = vmatpush.bf16.msra.mxu0 %v970
        %1007 = vmatpush.bf16.msra.mxu0 %v968
        %1008 = vmatmul.bf16.gmra.mxu0 %v977
        %v1009 = vpop.f32.mrf.mxu0
        %v1010 = vadd.f32 %v808, %v1009
        %v1011 = vpop.f32.mrf.mxu0
        %v1012 = vadd.f32 %v810, %v1011
        %1013 = vmatmul.bf16.gmra.mxu0 %v980
        %v1014 = vpop.f32.mrf.mxu0
        %v1015 = vadd.f32 %v813, %v1014
        %v1016 = vpop.f32.mrf.mxu0
        %v1017 = vadd.f32 %v815, %v1016
        %1018 = vmatmul.bf16.gmra.mxu0 %v983
        %v1019 = vpop.f32.mrf.mxu0
        %v1020 = vadd.f32 %v818, %v1019
        %v1021 = vpop.f32.mrf.mxu0
        %v1022 = vadd.f32 %v820, %v1021
        %1023 = vmatmul.bf16.gmra.mxu0 %v986
        %v1024 = vpop.f32.mrf.mxu0
        %v1025 = vadd.f32 %v823, %v1024
        %v1026 = vpop.f32.mrf.mxu0
        %v1027 = vadd.f32 %v825, %v1026
        %1028 = vmatmul.bf16.gmra.mxu0 %v989
        %v1029 = vpop.f32.mrf.mxu0
        %v1030 = vadd.f32 %v828, %v1029
        %v1031 = vpop.f32.mrf.mxu0
        %v1032 = vadd.f32 %v830, %v1031
        %1033 = vmatmul.bf16.gmra.mxu0 %v992
        %v1034 = vpop.f32.mrf.mxu0
        %v1035 = vadd.f32 %v833, %v1034
        %v1036 = vpop.f32.mrf.mxu0
        %v1037 = vadd.f32 %v835, %v1036
        %1038 = vmatmul.bf16.gmra.mxu0 %v995
        %v1039 = vpop.f32.mrf.mxu0
        %v1040 = vadd.f32 %v838, %v1039
        %v1041 = vpop.f32.mrf.mxu0
        %v1042 = vadd.f32 %v840, %v1041
        %1043 = vmatmul.bf16.gmra.mxu0 %v998
        %v1044 = vpop.f32.mrf.mxu0
        %v1045 = vadd.f32 %v843, %v1044
        %v1046 = vpop.f32.mrf.mxu0
        %v1047 = vadd.f32 %v845, %v1046
        %1048 = vdwg.mxu0
        %1049 = vmatpush.bf16.msra.mxu0 0
        %1050 = vmatpush.bf16.msra.mxu0 0
        %1051 = vmatpush.bf16.msra.mxu0 0
        %1052 = vmatpush.bf16.msra.mxu0 0
        %1053 = vmatpush.bf16.msra.mxu0 0
        %1054 = vmatpush.bf16.msra.mxu0 0
        %1055 = vmatpush.bf16.msra.mxu0 %v971
        %1056 = vmatpush.bf16.msra.mxu0 %v969
        %1057 = vmatmul.bf16.gmra.mxu0 %v977
        %v1058 = vpop.f32.mrf.mxu0
        %v1059 = vadd.f32 %v857, %v1058
        %v1060 = vpop.f32.mrf.mxu0
        %v1061 = vadd.f32 %v859, %v1060
        %1062 = vmatmul.bf16.gmra.mxu0 %v980
        %v1063 = vpop.f32.mrf.mxu0
        %v1064 = vadd.f32 %v862, %v1063
        %v1065 = vpop.f32.mrf.mxu0
        %v1066 = vadd.f32 %v864, %v1065
        %1067 = vmatmul.bf16.gmra.mxu0 %v983
        %v1068 = vpop.f32.mrf.mxu0
        %v1069 = vadd.f32 %v867, %v1068
        %v1070 = vpop.f32.mrf.mxu0
        %v1071 = vadd.f32 %v869, %v1070
        %1072 = vmatmul.bf16.gmra.mxu0 %v986
        %v1073 = vpop.f32.mrf.mxu0
        %v1074 = vadd.f32 %v872, %v1073
        %v1075 = vpop.f32.mrf.mxu0
        %v1076 = vadd.f32 %v874, %v1075
        %1077 = vmatmul.bf16.gmra.mxu0 %v989
        %v1078 = vpop.f32.mrf.mxu0
        %v1079 = vadd.f32 %v877, %v1078
        %v1080 = vpop.f32.mrf.mxu0
        %v1081 = vadd.f32 %v879, %v1080
        %1082 = vmatmul.bf16.gmra.mxu0 %v992
        %v1083 = vpop.f32.mrf.mxu0
        %v1084 = vadd.f32 %v882, %v1083
        %v1085 = vpop.f32.mrf.mxu0
        %v1086 = vadd.f32 %v884, %v1085
        %1087 = vmatmul.bf16.gmra.mxu0 %v995
        %v1088 = vpop.f32.mrf.mxu0
        %v1089 = vadd.f32 %v887, %v1088
        %v1090 = vpop.f32.mrf.mxu0
        %v1091 = vadd.f32 %v889, %v1090
        %1092 = vmatmul.bf16.gmra.mxu0 %v998
        %v1093 = vpop.f32.mrf.mxu0
        %v1094 = vadd.f32 %v892, %v1093
        %v1095 = vpop.f32.mrf.mxu0
        %v1096 = vadd.f32 %v894, %v1095
        %1097 = vdwg.mxu0
        %v1098 = vmax.f32 %v1010, 0.0
        %v1099 = vmax.f32 %v1059, 0.0
        %v1100 = vmax.f32 %v1012, 0.0
        %v1101 = vmax.f32 %v1061, 0.0
        %v1102 = vmax.f32 %v1015, 0.0
        %v1103 = vmax.f32 %v1064, 0.0
        %v1104 = vmax.f32 %v1017, 0.0
        %v1105 = vmax.f32 %v1066, 0.0
        %v1106 = vmax.f32 %v1020, 0.0
        %v1107 = vmax.f32 %v1069, 0.0
        %v1108 = vmax.f32 %v1022, 0.0
        %v1109 = vmax.f32 %v1071, 0.0
        %v1110 = vmax.f32 %v1025, 0.0
        %v1111 = vmax.f32 %v1074, 0.0
        %v1112 = vmax.f32 %v1027, 0.0
        %v1113 = vmax.f32 %v1076, 0.0
        %v1114 = vmax.f32 %v1030, 0.0
        %v1115 = vmax.f32 %v1079, 0.0
        %v1116 = vmax.f32 %v1032, 0.0
        %v1117 = vmax.f32 %v1081, 0.0
        %v1118 = vmax.f32 %v1035, 0.0
        %v1119 = vmax.f32 %v1084, 0.0
        %v1120 = vmax.f32 %v1037, 0.0
        %v1121 = vmax.f32 %v1086, 0.0
        %v1122 = vmax.f32 %v1040, 0.0
        %v1123 = vmax.f32 %v1089, 0.0
        %v1124 = vmax.f32 %v1042, 0.0
        %v1125 = vmax.f32 %v1091, 0.0
        %v1126 = vmax.f32 %v1045, 0.0
        %v1127 = vmax.f32 %v1094, 0.0
        %v1128 = vmax.f32 %v1047, 0.0
        %v1129 = vmax.f32 %v1096, 0.0
        %v1130 = vpack.c.bf16 %v1100, %v1098
        %v1131 = vpack.c.bf16 %v1101, %v1099
        %v1132 = vpack.c.bf16 %v1104, %v1102
        %v1133 = vpack.c.bf16 %v1105, %v1103
        %v1134 = vpack.c.bf16 %v1108, %v1106
        %v1135 = vpack.c.bf16 %v1109, %v1107
        %v1136 = vpack.c.bf16 %v1112, %v1110
        %v1137 = vpack.c.bf16 %v1113, %v1111
        %v1138 = vpack.c.bf16 %v1116, %v1114
        %v1139 = vpack.c.bf16 %v1117, %v1115
        %v1140 = vpack.c.bf16 %v1120, %v1118
        %v1141 = vpack.c.bf16 %v1121, %v1119
        %v1142 = vpack.c.bf16 %v1124, %v1122
        %v1143 = vpack.c.bf16 %v1125, %v1123
        %v1144 = vpack.c.bf16 %v1128, %v1126
        %v1145 = vpack.c.bf16 %v1129, %v1127
        %v1146 = vld [vmem:[%s540] sm:$0xf]
        %v1147 = vld [vmem:[%s540 + $0x4] sm:$0xf]
        %v1148 = vld [vmem:[%s540 + $0x8] sm:$0xf]
        %v1149 = vld [vmem:[%s540 + $0xc] sm:$0xf]
        %v1154 = vunpack.c.l.b16 %v1146
        %v1155 = vunpack.c.l.b16 %v1147
        %v1156 = vunpack.c.l.b16 %v1148
        %v1157 = vunpack.c.l.b16 %v1149
        %v1158 = vpack.c.b16 %v1155, %v1154
        %v1159 = vpack.c.b16 %v1157, %v1156
        %1162 = vmatpush.bf16.msra.mxu0 %v1144
        %1163 = vmatpush.bf16.msra.mxu0 %v1142
        %1164 = vmatpush.bf16.msra.mxu0 %v1140
        %1165 = vmatpush.bf16.msra.mxu0 %v1138
        %1166 = vmatpush.bf16.msra.mxu0 %v1136
        %1167 = vmatpush.bf16.msra.mxu0 %v1134
        %1168 = vmatpush.bf16.msra.mxu0 %v1132
        %1169 = vmatpush.bf16.msra.mxu0 %v1130
        %1170 = vmatmul.bf16.gmra.mxu0 %v1158
        %v1171 = vpop.f32.mrf.mxu0
        %v1172 = vadd.f32 0.0, %v1171
        %v1173 = vpop.f32.mrf.mxu0
        %v1174 = vadd.f32 0.0, %v1173
        %1175 = vmatmul.bf16.gmra.mxu0 %v1159
        %v1176 = vpop.f32.mrf.mxu0
        %v1177 = vadd.f32 0.0, %v1176
        %v1178 = vpop.f32.mrf.mxu0
        %v1179 = vadd.f32 0.0, %v1178
        %1180 = vdwg.mxu0
        %1181 = vmatpush.bf16.msra.mxu0 %v1145
        %1182 = vmatpush.bf16.msra.mxu0 %v1143
        %1183 = vmatpush.bf16.msra.mxu0 %v1141
        %1184 = vmatpush.bf16.msra.mxu0 %v1139
        %1185 = vmatpush.bf16.msra.mxu0 %v1137
        %1186 = vmatpush.bf16.msra.mxu0 %v1135
        %1187 = vmatpush.bf16.msra.mxu0 %v1133
        %1188 = vmatpush.bf16.msra.mxu0 %v1131
        %1189 = vmatmul.bf16.gmra.mxu0 %v1158
        %v1190 = vpop.f32.mrf.mxu0
        %v1191 = vadd.f32 0.0, %v1190
        %v1192 = vpop.f32.mrf.mxu0
        %v1193 = vadd.f32 0.0, %v1192
        %1194 = vmatmul.bf16.gmra.mxu0 %v1159
        %v1195 = vpop.f32.mrf.mxu0
        %v1196 = vadd.f32 0.0, %v1195
        %v1197 = vpop.f32.mrf.mxu0
        %v1198 = vadd.f32 0.0, %v1197
        %1199 = vdwg.mxu0
        // Predicated region
        $region97: #{tpu_custom_call.1} parent=71 // pred_check
          %p1200 = pneg %p658
        $region98: #{tpu_custom_call.1} parent=71 // pred_check_branch
          %1202 = sbr.rel (%p1200) target = $region100
        $region99: #{tpu_custom_call.1} parent=71 // pred_region
          %1203 = vst [vmem:[#allocation4] sm:$0xff] %v1172
          %1204 = vst [vmem:[#allocation4 + $0x8] sm:$0xff] %v1191
          %1205 = vst [vmem:[#allocation4 + $0x10] sm:$0xff] %v1174
          %1206 = vst [vmem:[#allocation4 + $0x18] sm:$0xff] %v1193
          %1207 = vst [vmem:[#allocation4 + $0x20] sm:$0xff] %v1177
          %1208 = vst [vmem:[#allocation4 + $0x28] sm:$0xff] %v1196
          %1209 = vst [vmem:[#allocation4 + $0x30] sm:$0xff] %v1179
          %1210 = vst [vmem:[#allocation4 + $0x38] sm:$0xff] %v1198
        $region100: #{tpu_custom_call.1} parent=71 // pred_fallthru
          _
        %p1211 = scmp.gt.s32.totalorder %s38, 0
        // Predicated region
        $region101: #{tpu_custom_call.1} parent=71 // pred_check
          %p1212 = pneg %p1211
        $region102: #{tpu_custom_call.1} parent=71 // pred_check_branch
          %1214 = sbr.rel (%p1212) target = $region104
        $region103: #{tpu_custom_call.1} parent=71 // pred_region
          %v1215 = vld [vmem:[#allocation4] sm:$0xff]
          %v1216 = vld [vmem:[#allocation4 + $0x8] sm:$0xff]
          %v1217 = vld [vmem:[#allocation4 + $0x10] sm:$0xff]
          %v1218 = vld [vmem:[#allocation4 + $0x18] sm:$0xff]
          %v1219 = vld [vmem:[#allocation4 + $0x20] sm:$0xff]
          %v1220 = vld [vmem:[#allocation4 + $0x28] sm:$0xff]
          %v1221 = vld [vmem:[#allocation4 + $0x30] sm:$0xff]
          %v1222 = vld [vmem:[#allocation4 + $0x38] sm:$0xff]
          %v1223 = vadd.f32 %v1215, %v1172
          %v1224 = vadd.f32 %v1216, %v1191
          %v1225 = vadd.f32 %v1217, %v1174
          %v1226 = vadd.f32 %v1218, %v1193
          %v1227 = vadd.f32 %v1219, %v1177
          %v1228 = vadd.f32 %v1220, %v1196
          %v1229 = vadd.f32 %v1221, %v1179
          %v1230 = vadd.f32 %v1222, %v1198
          %1231 = vst [vmem:[#allocation4] sm:$0xff] %v1223
          %1232 = vst [vmem:[#allocation4 + $0x8] sm:$0xff] %v1224
          %1233 = vst [vmem:[#allocation4 + $0x10] sm:$0xff] %v1225
          %1234 = vst [vmem:[#allocation4 + $0x18] sm:$0xff] %v1226
          %1235 = vst [vmem:[#allocation4 + $0x20] sm:$0xff] %v1227
          %1236 = vst [vmem:[#allocation4 + $0x28] sm:$0xff] %v1228
          %1237 = vst [vmem:[#allocation4 + $0x30] sm:$0xff] %v1229
          %1238 = vst [vmem:[#allocation4 + $0x38] sm:$0xff] %v1230
        $region104: #{tpu_custom_call.1} parent=71 // pred_fallthru
          _
        %p1239 = scmp.eq.s32.totalorder %s38, 1
        // Predicated region
        $region105: #{tpu_custom_call.1} parent=71 // pred_check
          %p1240 = pneg %p1239
        $region106: #{tpu_custom_call.1} parent=71 // pred_check_branch
          %1242 = sbr.rel (%p1240) target = $region108
        $region107: #{tpu_custom_call.1} parent=71 // pred_region
          %v1243 = vld [vmem:[#allocation2] sm:$0xff]
          %v1244 = vld [vmem:[#allocation2 + $0x8] sm:$0xff]
          %v1245 = vld [vmem:[#allocation2 + $0x10] sm:$0xff]
          %v1246 = vld [vmem:[#allocation2 + $0x18] sm:$0xff]
          %v1247 = vld [vmem:[#allocation2 + $0x20] sm:$0xff]
          %v1248 = vld [vmem:[#allocation2 + $0x28] sm:$0xff]
          %v1249 = vld [vmem:[#allocation2 + $0x30] sm:$0xff]
          %v1250 = vld [vmem:[#allocation2 + $0x38] sm:$0xff]
          %v1251 = vld [vmem:[#allocation4] sm:$0xff]
          %v1252 = vld [vmem:[#allocation4 + $0x8] sm:$0xff]
          %v1253 = vld [vmem:[#allocation4 + $0x10] sm:$0xff]
          %v1254 = vld [vmem:[#allocation4 + $0x18] sm:$0xff]
          %v1255 = vld [vmem:[#allocation4 + $0x20] sm:$0xff]
          %v1256 = vld [vmem:[#allocation4 + $0x28] sm:$0xff]
          %v1257 = vld [vmem:[#allocation4 + $0x30] sm:$0xff]
          %v1258 = vld [vmem:[#allocation4 + $0x38] sm:$0xff]
          %v1259 = vadd.f32 %v1243, %v1251
          %v1260 = vadd.f32 %v1244, %v1252
          %v1261 = vadd.f32 %v1245, %v1253
          %v1262 = vadd.f32 %v1246, %v1254
          %v1263 = vadd.f32 %v1247, %v1255
          %v1264 = vadd.f32 %v1248, %v1256
          %v1265 = vadd.f32 %v1249, %v1257
          %v1266 = vadd.f32 %v1250, %v1258
          %v1267 = vpack.c.bf16 %v1261, %v1259
          %v1268 = vpack.c.bf16 %v1262, %v1260
          %v1269 = vpack.c.bf16 %v1265, %v1263
          %v1270 = vpack.c.bf16 %v1266, %v1264
          %v1271 = vld [vmem:[%s560] sm:$0xff]
          %v1272 = vld [vmem:[%s560 + $0x8] sm:$0xff]
          %v1273 = vld [vmem:[%s560 + $0x10] sm:$0xff]
          %v1274 = vld [vmem:[%s560 + $0x18] sm:$0xff]
          %v1275 = vld [vmem:[%s560 + $0x20] sm:$0xff]
          %v1276 = vld [vmem:[%s560 + $0x28] sm:$0xff]
          %v1277 = vld [vmem:[%s560 + $0x30] sm:$0xff]
          %v1278 = vld [vmem:[%s560 + $0x38] sm:$0xff]
          %v1279 = vld [vmem:[%s560 + $0x40] sm:$0xff]
          %v1280 = vld [vmem:[%s560 + $0x48] sm:$0xff]
          %v1281 = vld [vmem:[%s560 + $0x50] sm:$0xff]
          %v1282 = vld [vmem:[%s560 + $0x58] sm:$0xff]
          %v1283 = vld [vmem:[%s560 + $0x60] sm:$0xff]
          %v1284 = vld [vmem:[%s560 + $0x68] sm:$0xff]
          %v1285 = vld [vmem:[%s560 + $0x70] sm:$0xff]
          %v1286 = vld [vmem:[%s560 + $0x78] sm:$0xff]
          %v1287 = vld [vmem:[%s560 + $0x80] sm:$0xff]
          %v1288 = vld [vmem:[%s560 + $0x88] sm:$0xff]
          %v1289 = vld [vmem:[%s560 + $0x90] sm:$0xff]
          %v1290 = vld [vmem:[%s560 + $0x98] sm:$0xff]
          %v1291 = vld [vmem:[%s560 + $0xa0] sm:$0xff]
          %v1292 = vld [vmem:[%s560 + $0xa8] sm:$0xff]
          %v1293 = vld [vmem:[%s560 + $0xb0] sm:$0xff]
          %v1294 = vld [vmem:[%s560 + $0xb8] sm:$0xff]
          %v1295 = vld [vmem:[%s560 + $0xc0] sm:$0xff]
          %v1296 = vld [vmem:[%s560 + $0xc8] sm:$0xff]
          %v1297 = vld [vmem:[%s560 + $0xd0] sm:$0xff]
          %v1298 = vld [vmem:[%s560 + $0xd8] sm:$0xff]
          %v1299 = vld [vmem:[%s560 + $0xe0] sm:$0xff]
          %v1300 = vld [vmem:[%s560 + $0xe8] sm:$0xff]
          %v1301 = vld [vmem:[%s560 + $0xf0] sm:$0xff]
          %v1302 = vld [vmem:[%s560 + $0xf8] sm:$0xff]
          %v1303 = vld [vmem:[%s570] sm:$0x3]
          %v1305 = vperm.slane %v1303, 0
          %v1306 = vperm.slane %v1303, 1
          %v1341 = vunpack.c.l.b16 %v1271
          %v1342 = vunpack.c.h.b16 %v1271
          %v1343 = vunpack.c.l.b16 %v1272
          %v1344 = vunpack.c.h.b16 %v1272
          %v1345 = vunpack.c.l.b16 %v1273
          %v1346 = vunpack.c.h.b16 %v1273
          %v1347 = vunpack.c.l.b16 %v1274
          %v1348 = vunpack.c.h.b16 %v1274
          %v1349 = vunpack.c.l.b16 %v1275
          %v1350 = vunpack.c.h.b16 %v1275
          %v1351 = vunpack.c.l.b16 %v1276
          %v1352 = vunpack.c.h.b16 %v1276
          %v1353 = vunpack.c.l.b16 %v1277
          %v1354 = vunpack.c.h.b16 %v1277
          %v1355 = vunpack.c.l.b16 %v1278
          %v1356 = vunpack.c.h.b16 %v1278
          %v1357 = vunpack.c.l.b16 %v1279
          %v1358 = vunpack.c.h.b16 %v1279
          %v1359 = vunpack.c.l.b16 %v1280
          %v1360 = vunpack.c.h.b16 %v1280
          %v1361 = vunpack.c.l.b16 %v1281
          %v1362 = vunpack.c.h.b16 %v1281
          %v1363 = vunpack.c.l.b16 %v1282
          %v1364 = vunpack.c.h.b16 %v1282
          %v1365 = vunpack.c.l.b16 %v1283
          %v1366 = vunpack.c.h.b16 %v1283
          %v1367 = vunpack.c.l.b16 %v1284
          %v1368 = vunpack.c.h.b16 %v1284
          %v1369 = vunpack.c.l.b16 %v1285
          %v1370 = vunpack.c.h.b16 %v1285
          %v1371 = vunpack.c.l.b16 %v1286
          %v1372 = vunpack.c.h.b16 %v1286
          %v1373 = vunpack.c.l.b16 %v1287
          %v1374 = vunpack.c.h.b16 %v1287
          %v1375 = vunpack.c.l.b16 %v1288
          %v1376 = vunpack.c.h.b16 %v1288
          %v1377 = vunpack.c.l.b16 %v1289
          %v1378 = vunpack.c.h.b16 %v1289
          %v1379 = vunpack.c.l.b16 %v1290
          %v1380 = vunpack.c.h.b16 %v1290
          %v1381 = vunpack.c.l.b16 %v1291
          %v1382 = vunpack.c.h.b16 %v1291
          %v1383 = vunpack.c.l.b16 %v1292
          %v1384 = vunpack.c.h.b16 %v1292
          %v1385 = vunpack.c.l.b16 %v1293
          %v1386 = vunpack.c.h.b16 %v1293
          %v1387 = vunpack.c.l.b16 %v1294
          %v1388 = vunpack.c.h.b16 %v1294
          %v1389 = vunpack.c.l.b16 %v1295
          %v1390 = vunpack.c.h.b16 %v1295
          %v1391 = vunpack.c.l.b16 %v1296
          %v1392 = vunpack.c.h.b16 %v1296
          %v1393 = vunpack.c.l.b16 %v1297
          %v1394 = vunpack.c.h.b16 %v1297
          %v1395 = vunpack.c.l.b16 %v1298
          %v1396 = vunpack.c.h.b16 %v1298
          %v1397 = vunpack.c.l.b16 %v1299
          %v1398 = vunpack.c.h.b16 %v1299
          %v1399 = vunpack.c.l.b16 %v1300
          %v1400 = vunpack.c.h.b16 %v1300
          %v1401 = vunpack.c.l.b16 %v1301
          %v1402 = vunpack.c.h.b16 %v1301
          %v1403 = vunpack.c.l.b16 %v1302
          %v1404 = vunpack.c.h.b16 %v1302
          %v1405 = vpack.c.b16 %v1343, %v1341
          %v1406 = vpack.c.b16 %v1344, %v1342
          %v1407 = vpack.c.b16 %v1347, %v1345
          %v1408 = vpack.c.b16 %v1348, %v1346
          %v1409 = vpack.c.b16 %v1351, %v1349
          %v1410 = vpack.c.b16 %v1352, %v1350
          %v1411 = vpack.c.b16 %v1355, %v1353
          %v1412 = vpack.c.b16 %v1356, %v1354
          %v1413 = vpack.c.b16 %v1359, %v1357
          %v1414 = vpack.c.b16 %v1360, %v1358
          %v1415 = vpack.c.b16 %v1363, %v1361
          %v1416 = vpack.c.b16 %v1364, %v1362
          %v1417 = vpack.c.b16 %v1367, %v1365
          %v1418 = vpack.c.b16 %v1368, %v1366
          %v1419 = vpack.c.b16 %v1371, %v1369
          %v1420 = vpack.c.b16 %v1372, %v1370
          %v1421 = vpack.c.b16 %v1375, %v1373
          %v1422 = vpack.c.b16 %v1376, %v1374
          %v1423 = vpack.c.b16 %v1379, %v1377
          %v1424 = vpack.c.b16 %v1380, %v1378
          %v1425 = vpack.c.b16 %v1383, %v1381
          %v1426 = vpack.c.b16 %v1384, %v1382
          %v1427 = vpack.c.b16 %v1387, %v1385
          %v1428 = vpack.c.b16 %v1388, %v1386
          %v1429 = vpack.c.b16 %v1391, %v1389
          %v1430 = vpack.c.b16 %v1392, %v1390
          %v1431 = vpack.c.b16 %v1395, %v1393
          %v1432 = vpack.c.b16 %v1396, %v1394
          %v1433 = vpack.c.b16 %v1399, %v1397
          %v1434 = vpack.c.b16 %v1400, %v1398
          %v1435 = vpack.c.b16 %v1403, %v1401
          %v1436 = vpack.c.b16 %v1404, %v1402
          %1469 = vmatpush.bf16.msra.mxu0 %v1419
          %1470 = vmatpush.bf16.msra.mxu0 %v1417
          %1471 = vmatpush.bf16.msra.mxu0 %v1415
          %1472 = vmatpush.bf16.msra.mxu0 %v1413
          %1473 = vmatpush.bf16.msra.mxu0 %v1411
          %1474 = vmatpush.bf16.msra.mxu0 %v1409
          %1475 = vmatpush.bf16.msra.mxu0 %v1407
          %1476 = vmatpush.bf16.msra.mxu0 %v1405
          %1477 = vmatmul.bf16.gmra.mxu0 %v1267
          %v1478 = vpop.f32.mrf.mxu0
          %v1479 = vadd.f32 %v1305, %v1478
          %v1480 = vpop.f32.mrf.mxu0
          %v1481 = vadd.f32 %v1305, %v1480
          %1482 = vmatmul.bf16.gmra.mxu0 %v1269
          %v1483 = vpop.f32.mrf.mxu0
          %v1484 = vadd.f32 %v1305, %v1483
          %v1485 = vpop.f32.mrf.mxu0
          %v1486 = vadd.f32 %v1305, %v1485
          %1487 = vdwg.mxu0
          %1488 = vmatpush.bf16.msra.mxu0 %v1435
          %1489 = vmatpush.bf16.msra.mxu0 %v1433
          %1490 = vmatpush.bf16.msra.mxu0 %v1431
          %1491 = vmatpush.bf16.msra.mxu0 %v1429
          %1492 = vmatpush.bf16.msra.mxu0 %v1427
          %1493 = vmatpush.bf16.msra.mxu0 %v1425
          %1494 = vmatpush.bf16.msra.mxu0 %v1423
          %1495 = vmatpush.bf16.msra.mxu0 %v1421
          %1496 = vmatmul.bf16.gmra.mxu0 %v1268
          %v1497 = vpop.f32.mrf.mxu0
          %v1498 = vadd.f32 %v1479, %v1497
          %v1499 = vpop.f32.mrf.mxu0
          %v1500 = vadd.f32 %v1481, %v1499
          %1501 = vmatmul.bf16.gmra.mxu0 %v1270
          %v1502 = vpop.f32.mrf.mxu0
          %v1503 = vadd.f32 %v1484, %v1502
          %v1504 = vpop.f32.mrf.mxu0
          %v1505 = vadd.f32 %v1486, %v1504
          %1506 = vdwg.mxu0
          %1507 = vmatpush.bf16.msra.mxu0 %v1420
          %1508 = vmatpush.bf16.msra.mxu0 %v1418
          %1509 = vmatpush.bf16.msra.mxu0 %v1416
          %1510 = vmatpush.bf16.msra.mxu0 %v1414
          %1511 = vmatpush.bf16.msra.mxu0 %v1412
          %1512 = vmatpush.bf16.msra.mxu0 %v1410
          %1513 = vmatpush.bf16.msra.mxu0 %v1408
          %1514 = vmatpush.bf16.msra.mxu0 %v1406
          %1515 = vmatmul.bf16.gmra.mxu0 %v1267
          %v1516 = vpop.f32.mrf.mxu0
          %v1517 = vadd.f32 %v1306, %v1516
          %v1518 = vpop.f32.mrf.mxu0
          %v1519 = vadd.f32 %v1306, %v1518
          %1520 = vmatmul.bf16.gmra.mxu0 %v1269
          %v1521 = vpop.f32.mrf.mxu0
          %v1522 = vadd.f32 %v1306, %v1521
          %v1523 = vpop.f32.mrf.mxu0
          %v1524 = vadd.f32 %v1306, %v1523
          %1525 = vdwg.mxu0
          %1526 = vmatpush.bf16.msra.mxu0 %v1436
          %1527 = vmatpush.bf16.msra.mxu0 %v1434
          %1528 = vmatpush.bf16.msra.mxu0 %v1432
          %1529 = vmatpush.bf16.msra.mxu0 %v1430
          %1530 = vmatpush.bf16.msra.mxu0 %v1428
          %1531 = vmatpush.bf16.msra.mxu0 %v1426
          %1532 = vmatpush.bf16.msra.mxu0 %v1424
          %1533 = vmatpush.bf16.msra.mxu0 %v1422
          %1534 = vmatmul.bf16.gmra.mxu0 %v1268
          %v1535 = vpop.f32.mrf.mxu0
          %v1536 = vadd.f32 %v1517, %v1535
          %v1537 = vpop.f32.mrf.mxu0
          %v1538 = vadd.f32 %v1519, %v1537
          %1539 = vmatmul.bf16.gmra.mxu0 %v1270
          %v1540 = vpop.f32.mrf.mxu0
          %v1541 = vadd.f32 %v1522, %v1540
          %v1542 = vpop.f32.mrf.mxu0
          %v1543 = vadd.f32 %v1524, %v1542
          %1544 = vdwg.mxu0
          %v1545 = vmax.f32 %v1498, 0.0
          %v1546 = vmax.f32 %v1536, 0.0
          %v1547 = vmax.f32 %v1500, 0.0
          %v1548 = vmax.f32 %v1538, 0.0
          %v1549 = vmax.f32 %v1503, 0.0
          %v1550 = vmax.f32 %v1541, 0.0
          %v1551 = vmax.f32 %v1505, 0.0
          %v1552 = vmax.f32 %v1543, 0.0
          %1553 = vst [vmem:[#allocation2] sm:$0xff] %v1545
          %1554 = vst [vmem:[#allocation2 + $0x8] sm:$0xff] %v1546
          %1555 = vst [vmem:[#allocation2 + $0x10] sm:$0xff] %v1547
          %1556 = vst [vmem:[#allocation2 + $0x18] sm:$0xff] %v1548
          %1557 = vst [vmem:[#allocation2 + $0x20] sm:$0xff] %v1549
          %1558 = vst [vmem:[#allocation2 + $0x28] sm:$0xff] %v1550
          %1559 = vst [vmem:[#allocation2 + $0x30] sm:$0xff] %v1551
          %1560 = vst [vmem:[#allocation2 + $0x38] sm:$0xff] %v1552
          %v1561 = vpack.c.bf16 %v1546, %v1545
          %v1562 = vpack.c.bf16 %v1548, %v1547
          %v1563 = vpack.c.bf16 %v1550, %v1549
          %v1564 = vpack.c.bf16 %v1552, %v1551
          %1565 = vst [vmem:[#allocation3] sm:$0xff] %v1561
          %1566 = vst [vmem:[#allocation3 + $0x8] sm:$0xff] %v1562
          %1567 = vst [vmem:[#allocation3 + $0x10] sm:$0xff] %v1563
          %1568 = vst [vmem:[#allocation3 + $0x18] sm:$0xff] %v1564
        $region108: #{tpu_custom_call.1} parent=71 // pred_fallthru
          _
        %p1569 = scmp.eq.s32.totalorder %s37, 4
        %p1570 = pnand %p1569, %p1239
        %p1571 = pneg %p1570
        // Predicated region
        $region109: #{tpu_custom_call.1} parent=71 // pred_check
          _
        $region110: #{tpu_custom_call.1} parent=71 // pred_check_branch
          %1573 = sbr.rel (%p1570) target = $region112
        $region111: #{tpu_custom_call.1} parent=71 // pred_region
          %v1574 = vld [vmem:[%s8] sm:$0x3]
          %v1575 = vld [vmem:[#allocation2] sm:$0xff]
          %v1576 = vld [vmem:[#allocation2 + $0x8] sm:$0xff]
          %v1577 = vld [vmem:[#allocation2 + $0x10] sm:$0xff]
          %v1578 = vld [vmem:[#allocation2 + $0x18] sm:$0xff]
          %v1579 = vld [vmem:[#allocation2 + $0x20] sm:$0xff]
          %v1580 = vld [vmem:[#allocation2 + $0x28] sm:$0xff]
          %v1581 = vld [vmem:[#allocation2 + $0x30] sm:$0xff]
          %v1582 = vld [vmem:[#allocation2 + $0x38] sm:$0xff]
          %v1584 = vsel %vm773, %v1574, 0
          %1586 = vmatpush.msra.mxu0 0.0
          %1587 = vmatpush.msra.mxu0 0.0
          %1588 = vmatpush.msra.mxu0 0.0
          %1589 = vmatpush.msra.mxu0 0.0
          %1590 = vmatpush.msra.mxu0 0.0
          %1591 = vmatpush.msra.mxu0 0.0
          %1592 = vmatpush.msra.mxu0 0.0
          %1593 = vmatpush.msra.mxu0 0.0
          %1594 = vmatpush.msra.mxu0 0.0
          %1595 = vmatpush.msra.mxu0 0.0
          %1596 = vmatpush.msra.mxu0 0.0
          %1597 = vmatpush.msra.mxu0 0.0
          %1598 = vmatpush.msra.mxu0 %v1581
          %1599 = vmatpush.msra.mxu0 %v1579
          %1600 = vmatpush.msra.mxu0 %v1577
          %1601 = vmatpush.msra.mxu0 %v1575
          %1602 = vmatmul.f32.gmra.mxu0 %v1584
          %v1603 = vpop.f32.mrf.mxu0
          %v1604 = vadd.f32 0.0, %v1603
          %1605 = vdwg.mxu0
          %1606 = vmatpush.msra.mxu0 0.0
          %1607 = vmatpush.msra.mxu0 0.0
          %1608 = vmatpush.msra.mxu0 0.0
          %1609 = vmatpush.msra.mxu0 0.0
          %1610 = vmatpush.msra.mxu0 0.0
          %1611 = vmatpush.msra.mxu0 0.0
          %1612 = vmatpush.msra.mxu0 0.0
          %1613 = vmatpush.msra.mxu0 0.0
          %1614 = vmatpush.msra.mxu0 0.0
          %1615 = vmatpush.msra.mxu0 0.0
          %1616 = vmatpush.msra.mxu0 0.0
          %1617 = vmatpush.msra.mxu0 0.0
          %1618 = vmatpush.msra.mxu0 %v1582
          %1619 = vmatpush.msra.mxu0 %v1580
          %1620 = vmatpush.msra.mxu0 %v1578
          %1621 = vmatpush.msra.mxu0 %v1576
          %1622 = vmatmul.f32.gmra.mxu0 %v1584
          %v1623 = vpop.f32.mrf.mxu0
          %v1624 = vadd.f32 0.0, %v1623
          %1625 = vdwg.mxu0
          %v1626 = vld [vmem:[%s9] sm:$0xff]
          %v1627 = vld [vmem:[%s9 + $0x8] sm:$0xff]
          %v1628 = vld [vmem:[%s9 + $0x10] sm:$0xff]
          %v1629 = vld [vmem:[%s9 + $0x18] sm:$0xff]
          %v1630 = vld [vmem:[%s9 + $0x20] sm:$0xff]
          %v1631 = vld [vmem:[%s9 + $0x28] sm:$0xff]
          %v1632 = vld [vmem:[%s9 + $0x30] sm:$0xff]
          %v1633 = vld [vmem:[%s9 + $0x38] sm:$0xff]
          %v1634 = vld [vmem:[%s9 + $0x40] sm:$0xff]
          %v1635 = vld [vmem:[%s9 + $0x48] sm:$0xff]
          %v1636 = vld [vmem:[%s9 + $0x50] sm:$0xff]
          %v1637 = vld [vmem:[%s9 + $0x58] sm:$0xff]
          %v1638 = vld [vmem:[%s9 + $0x60] sm:$0xff]
          %v1639 = vld [vmem:[%s9 + $0x68] sm:$0xff]
          %v1640 = vld [vmem:[%s9 + $0x70] sm:$0xff]
          %v1641 = vld [vmem:[%s9 + $0x78] sm:$0xff]
          %v1642 = vld [vmem:[%s9 + $0x80] sm:$0xff]
          %v1643 = vld [vmem:[%s9 + $0x88] sm:$0xff]
          %v1644 = vld [vmem:[%s9 + $0x90] sm:$0xff]
          %v1645 = vld [vmem:[%s9 + $0x98] sm:$0xff]
          %v1646 = vld [vmem:[%s9 + $0xa0] sm:$0xff]
          %v1647 = vld [vmem:[%s9 + $0xa8] sm:$0xff]
          %v1648 = vld [vmem:[%s9 + $0xb0] sm:$0xff]
          %v1649 = vld [vmem:[%s9 + $0xb8] sm:$0xff]
          %v1650 = vld [vmem:[%s9 + $0xc0] sm:$0xff]
          %v1651 = vld [vmem:[%s9 + $0xc8] sm:$0xff]
          %v1652 = vld [vmem:[%s9 + $0xd0] sm:$0xff]
          %v1653 = vld [vmem:[%s9 + $0xd8] sm:$0xff]
          %v1654 = vld [vmem:[%s9 + $0xe0] sm:$0xff]
          %v1655 = vld [vmem:[%s9 + $0xe8] sm:$0xff]
          %v1656 = vld [vmem:[%s9 + $0xf0] sm:$0xff]
          %v1657 = vld [vmem:[%s9 + $0xf8] sm:$0xff]
          %v1658 = vld [vmem:[%s10] sm:$0x1]
          %v1660 = vperm.slane %v1658, 0
          %1662 = vmatpush.msra.mxu0 %v1641
          %1663 = vmatpush.msra.mxu0 %v1640
          %1664 = vmatpush.msra.mxu0 %v1639
          %1665 = vmatpush.msra.mxu0 %v1638
          %1666 = vmatpush.msra.mxu0 %v1637
          %1667 = vmatpush.msra.mxu0 %v1636
          %1668 = vmatpush.msra.mxu0 %v1635
          %1669 = vmatpush.msra.mxu0 %v1634
          %1670 = vmatpush.msra.mxu0 %v1633
          %1671 = vmatpush.msra.mxu0 %v1632
          %1672 = vmatpush.msra.mxu0 %v1631
          %1673 = vmatpush.msra.mxu0 %v1630
          %1674 = vmatpush.msra.mxu0 %v1629
          %1675 = vmatpush.msra.mxu0 %v1628
          %1676 = vmatpush.msra.mxu0 %v1627
          %1677 = vmatpush.msra.mxu0 %v1626
          %1678 = vmatmul.f32.gmra.mxu0 %v1604
          %v1679 = vpop.f32.mrf.mxu0
          %v1680 = vadd.f32 %v1660, %v1679
          %1681 = vdwg.mxu0
          %1682 = vmatpush.msra.mxu0 %v1657
          %1683 = vmatpush.msra.mxu0 %v1656
          %1684 = vmatpush.msra.mxu0 %v1655
          %1685 = vmatpush.msra.mxu0 %v1654
          %1686 = vmatpush.msra.mxu0 %v1653
          %1687 = vmatpush.msra.mxu0 %v1652
          %1688 = vmatpush.msra.mxu0 %v1651
          %1689 = vmatpush.msra.mxu0 %v1650
          %1690 = vmatpush.msra.mxu0 %v1649
          %1691 = vmatpush.msra.mxu0 %v1648
          %1692 = vmatpush.msra.mxu0 %v1647
          %1693 = vmatpush.msra.mxu0 %v1646
          %1694 = vmatpush.msra.mxu0 %v1645
          %1695 = vmatpush.msra.mxu0 %v1644
          %1696 = vmatpush.msra.mxu0 %v1643
          %1697 = vmatpush.msra.mxu0 %v1642
          %1698 = vmatmul.f32.gmra.mxu0 %v1624
          %v1699 = vpop.f32.mrf.mxu0
          %v1700 = vadd.f32 %v1680, %v1699
          %1701 = vdwg.mxu0
          %v1702 = vmax.f32 %v1700, 0.0
          %v1703 = vld [vmem:[%s11] sm:$0xff]
          %v1704 = vld [vmem:[%s11 + $0x8] sm:$0xff]
          %v1705 = vld [vmem:[%s11 + $0x10] sm:$0xff]
          %v1706 = vld [vmem:[%s11 + $0x18] sm:$0xff]
          %v1707 = vld [vmem:[%s11 + $0x20] sm:$0xff]
          %v1708 = vld [vmem:[%s11 + $0x28] sm:$0xff]
          %v1709 = vld [vmem:[%s11 + $0x30] sm:$0xff]
          %v1710 = vld [vmem:[%s11 + $0x38] sm:$0xff]
          %v1711 = vld [vmem:[%s11 + $0x40] sm:$0xff]
          %v1712 = vld [vmem:[%s11 + $0x48] sm:$0xff]
          %v1713 = vld [vmem:[%s11 + $0x50] sm:$0xff]
          %v1714 = vld [vmem:[%s11 + $0x58] sm:$0xff]
          %v1715 = vld [vmem:[%s11 + $0x60] sm:$0xff]
          %v1716 = vld [vmem:[%s11 + $0x68] sm:$0xff]
          %v1717 = vld [vmem:[%s11 + $0x70] sm:$0xff]
          %v1718 = vld [vmem:[%s11 + $0x78] sm:$0xff]
          %v1719 = vld [vmem:[#allocation5] sm:$0x1]
          %v1721 = vperm.slane %v1719, 0
          %1723 = vmatpush.msra.mxu0 %v1718
          %1724 = vmatpush.msra.mxu0 %v1717
          %1725 = vmatpush.msra.mxu0 %v1716
          %1726 = vmatpush.msra.mxu0 %v1715
          %1727 = vmatpush.msra.mxu0 %v1714
          %1728 = vmatpush.msra.mxu0 %v1713
          %1729 = vmatpush.msra.mxu0 %v1712
          %1730 = vmatpush.msra.mxu0 %v1711
          %1731 = vmatpush.msra.mxu0 %v1710
          %1732 = vmatpush.msra.mxu0 %v1709
          %1733 = vmatpush.msra.mxu0 %v1708
          %1734 = vmatpush.msra.mxu0 %v1707
          %1735 = vmatpush.msra.mxu0 %v1706
          %1736 = vmatpush.msra.mxu0 %v1705
          %1737 = vmatpush.msra.mxu0 %v1704
          %1738 = vmatpush.msra.mxu0 %v1703
          %1739 = vmatmul.f32.gmra.mxu0 %v1702
          %v1740 = vpop.f32.mrf.mxu0
          %v1741 = vadd.f32 %v1721, %v1740
          %1742 = vdwg.mxu0
          %v1743 = vxor.u32 %v1741, 2147483648
          %v1744 = vmul.f32 %v1743, 1.442695
          %v1745 = vpow.pop %v1744
          %v1746 = vadd.f32 %v1745, 1.0
          %v1747 = vrcp.pop %v1746
          %v1748 = vmul.f32 %v1746, %v1747
          %v1749 = vsub.f32 1.0, %v1748
          %v1750 = vmul.f32 %v1747, %v1749
          %v1751 = vadd.f32 %v1747, %v1750
          %vm1752 = vweird.f32 %v1746
          %vm1753 = vweird.f32 %v1747
          %vm1754 = vmor %vm1752, %vm1753
          %v1755 = vsel %vm1754, %v1747, %v1751
          %v1756 = vand.u32 2147483647, %v1746
          %vm1757 = vcmp.eq.f32.partialorder %v1756, 8.507059e+37
          %v1758 = vand.u32 %v1746, 2147483648
          %v1759 = vor.u32 1.1754944e-38, %v1758
          %v1760 = vsel %vm1757, %v1759, %v1755
          %v1761 = vmul.f32 1.0, %v1760
          %vm1762 = vcmask 1024
          %1763 = vst.msk [vmem:[%s13] sm:$0x3] %vm1762, %v1761
        $region112: #{tpu_custom_call.1} parent=71 // pred_fallthru
          _
        // Predicated region
        $region113: #{tpu_custom_call.1} parent=71 // pred_check
          %p1764 = pneg %p366
        $region114: #{tpu_custom_call.1} parent=71 // pred_check_branch
          %1766 = sbr.rel (%p1764) target = $region116
        $region115: #{tpu_custom_call.1} parent=71 // pred_region
          _
        $region116: #{tpu_custom_call.1} parent=71 // pred_fallthru
          _
        // Predicated region
        $region117: #{tpu_custom_call.1} parent=71 // pred_check
          %p1767 = pneg %p366
        $region118: #{tpu_custom_call.1} parent=71 // pred_check_branch
          %1769 = sbr.rel (%p1767) target = $region120
        $region119: #{tpu_custom_call.1} parent=71 // pred_region
          _
        $region120: #{tpu_custom_call.1} parent=71 // pred_fallthru
          _
      $region72: #{tpu_custom_call.1} parent=5 // pred_fallthru
        _
      %p1770 = scmp.le.s32.totalorder 2, %s28
      // Predicated region
      $region121: #{tpu_custom_call.1} parent=5 // pred_check
        %p1771 = pneg %p1770
      $region122: #{tpu_custom_call.1} parent=5 // pred_check_branch
        %1773 = sbr.rel (%p1771) target = $region124
      $region123: #{tpu_custom_call.1} parent=5 // pred_region
        %s1774 = ssub.s32 %s28, 2
      $region124: #{tpu_custom_call.1} parent=5 // pred_fallthru
        _
    $region6: #{tpu_custom_call.1} parent=1 // loop_footer
      %s32 = sadd.s32 1, %s28
    $region7: #{tpu_custom_call.1} parent=1 // loop_footer_branch
      %27 = sbr.rel target = $region3
    $region8: #{tpu_custom_call.1} parent=1 // loop_exit
      _
    %1775 = vsyncpa [#allocation7], 1
    %s1776 = scalar_lea.sflag [#allocation7], 1
    %1777 = vsyncpa %s1776, 1
    %1778 = vsyncpa [#allocation9], 1
    %s1779 = scalar_lea.sflag [#allocation9], 1
    %1780 = vsyncpa %s1779, 1
    %1781 = vsyncpa [#allocation12], 1
    %s1782 = scalar_lea.sflag [#allocation12], 1
    %1783 = vsyncpa %s1782, 1

</llo_original>
